<compile_context>
chip_gen: v6e
topology: v6e:2x2x1
jax: 0.10.0
libtpu: 0.0.40
codegen_flags: <defaults>
</compile_context>

<pallas_src>
import math
import numpy as np
import jax
import jax.numpy as jnp
from jax.experimental import pallas as pl
from jax.experimental.pallas import tpu as pltpu

# ----------------------------- configuration -----------------------------
EMBED_DIM = 32
NUM_HEADS = 8
HEAD_DIM = EMBED_DIM // NUM_HEADS
SCALE = 1.0 / math.sqrt(HEAD_DIM)
LN_EPS = 1e-5
BATCH = 2
SEQ = 8
BS = BATCH * SEQ               # batch folded into rows (sublanes)
E2 = 2 * EMBED_DIM             # joint [video | landmark] lane width
H2 = 2 * NUM_HEADS             # heads of both attentions

# column offsets inside the packed (64, 784) weight slab
C_QKV = 0                      # (64, 192) fused QKV for both attentions
C_OUT = C_QKV + 6 * EMBED_DIM  # (64, 64)  block-diag output projection
C_FUSE = C_OUT + E2            # (64, 192) [f_w1 | gate_w | I;I]
C_LN = C_FUSE + 6 * EMBED_DIM  # (64, 64)  per-half averaging matrix
C_SEL = C_LN + E2              # (64, 16)  head selector (scale folded in)
C_EXP = C_SEL + H2             # (16, 64)  head expander
C_AUX = C_EXP + E2             # (8, 192)  bias / LayerNorm rows
SLAB_COLS = C_AUX + 6 * EMBED_DIM   # 784

# aux row indices
R_BQKV, R_BFUSE, R_BOUT, R_GCAT, R_BCAT, R_LN3G, R_LN3B, R_BF2 = range(8)


def _gelu_exact(x):
    # PyTorch nn.GELU() default = exact erf-based GELU.
    return 0.5 * x * (1.0 + jax.lax.erf(x * (1.0 / math.sqrt(2.0))))


# ----------------------------- kernel -----------------------------
def fusion_kernel(x_ref, w_ref, fw2_ref, mask_ref, out_ref):
    f32 = jnp.float32
    E = EMBED_DIM

    x = x_ref[...]                                               # (16, 64) = [video | landmark]

    # (1) fused QKV for BOTH cross-attentions: one (16,64)@(64,192) matmul.
    qkv = jnp.dot(x, w_ref[:, C_QKV:C_QKV + 6 * E], preferred_element_type=f32)
    qkv = qkv + w_ref[R_BQKV:R_BQKV + 1, C_AUX:C_AUX + 6 * E]
    q_all = qkv[:, 0:E2]                                          # [Q1 | Q2]
    k_all = qkv[:, E2:2 * E2]                                     # [K1 | K2]
    v_all = qkv[:, 2 * E2:3 * E2]                                 # [V1 | V2]

    # (2) all-head scores: broadcast product + ONE 0/1 head-selector matmul (scale baked in).
    prod = k_all[:, None, :] * q_all[None, :, :]                  # (16 k, 16 q, 64)
    s = jnp.dot(prod.reshape(BS * BS, E2), w_ref[:, C_SEL:C_SEL + H2],
                preferred_element_type=f32)                       # (256, 16)
    s = s.reshape(BS, BS, H2)                                     # (k, q, head')

    # (3) per-head softmax over keys (leading axis -> cross-page VPU reductions);
    #     cross-batch keys removed with a multiplicative 0/1 mask after exp (exact softmax).
    m = jnp.max(s, axis=0, keepdims=True)
    e = jnp.exp(s - m) * mask_ref[...]                            # mask: (16 k, 16 q, 1)
    p = e / jnp.sum(e, axis=0, keepdims=True)                     # (k, q, head')

    # (4) PV + head concat: expand head probs to the 64 ctx lanes with ONE matmul,
    #     multiply by [V1|V2] and reduce over keys (leading axis again).
    p_exp = jnp.dot(p.reshape(BS * BS, H2), w_ref[0:H2, C_EXP:C_EXP + E2],
                    preferred_element_type=f32)                   # (256, 64)
    ctx = jnp.sum(p_exp.reshape(BS, BS, E2) * v_all[:, None, :], axis=0)   # (16 q, 64)

    # (5) both output projections in one block-diagonal (16,64)@(64,64) matmul.
    att = jnp.dot(ctx, w_ref[:, C_OUT:C_OUT + E2], preferred_element_type=f32)
    att = att + w_ref[R_BOUT:R_BOUT + 1, C_AUX:C_AUX + E2]

    # (6) residual + both LayerNorms + modality weighting on the joint (16,64) slab.
    y = x + att
    mln = w_ref[:, C_LN:C_LN + E2]                                # per-half averaging matrix
    mu = jnp.dot(y, mln, preferred_element_type=f32)              # per-half mean (broadcast)
    ex2 = jnp.dot(y * y, mln, preferred_element_type=f32)         # per-half E[x^2]
    yn = (y - mu) * jax.lax.rsqrt(ex2 - mu * mu + LN_EPS)
    wcat = (yn * w_ref[R_GCAT:R_GCAT + 1, C_AUX:C_AUX + E2]
            + w_ref[R_BCAT:R_BCAT + 1, C_AUX:C_AUX + E2])         # = [wv | wl]

    # (7) fusion hidden + gate + basic sum in one (16,64)@(64,192) matmul.
    comb = jnp.dot(wcat, w_ref[:, C_FUSE:C_FUSE + 6 * E], preferred_element_type=f32)
    comb = comb + w_ref[R_BFUSE:R_BFUSE + 1, C_AUX:C_AUX + 6 * E]
    h1 = _gelu_exact(comb[:, 0:4 * E])                            # (16, 128), full lane tile
    gate = jax.nn.sigmoid(comb[:, 4 * E:5 * E])                   # (16, 32)
    basic = comb[:, 5 * E:6 * E]                                  # wv + wl

    enh = jnp.dot(h1, fw2_ref[...], preferred_element_type=f32)
    enh = enh + w_ref[R_BF2:R_BF2 + 1, C_AUX:C_AUX + E]
    fused = gate * enh + (1.0 - gate) * basic

    # (8) final LayerNorm.
    mu3 = jnp.mean(fused, axis=-1, keepdims=True)
    var3 = jnp.mean((fused - mu3) ** 2, axis=-1, keepdims=True)
    out_ref[...] = ((fused - mu3) * jax.lax.rsqrt(var3 + LN_EPS)
                    * w_ref[R_LN3G:R_LN3G + 1, C_AUX:C_AUX + E]
                    + w_ref[R_LN3B:R_LN3B + 1, C_AUX:C_AUX + E])
    # TODO(synk): dropout layers are identity (eval-mode forward).


# ----------------------------- parameter packing -----------------------------
def pack_params(p):
    E = EMBED_DIM
    D = HEAD_DIM
    f32 = jnp.float32
    z = jnp.zeros((E, E), f32)

    # Fused QKV weight (2E, 6E); rows 0:E act on video lanes, E:2E on landmark lanes.
    # Column blocks: [Q1 | Q2 | K1 | K2 | V1 | V2]
    #   attn1 = video->landmark (module "v_*"): Q1 = video@v_wq, K1 = landmark@v_wk, V1 = landmark@v_wv
    #   attn2 = landmark->video (module "l_*"): Q2 = landmark@l_wq, K2 = video@l_wk, V2 = video@l_wv
    top = jnp.concatenate([p["v_wq"], z,         z,         p["l_wk"], z,         p["l_wv"]], axis=1)
    bot = jnp.concatenate([z,         p["l_wq"], p["v_wk"], z,         p["v_wv"], z        ], axis=1)
    w_qkv = jnp.concatenate([top, bot], axis=0)                                   # (64, 192)
    b_qkv = jnp.concatenate([p["v_bq"], p["l_bq"], p["v_bk"], p["l_bk"],
                             p["v_bv"], p["l_bv"]], axis=1)                       # (1, 192)

    # Block-diagonal output projection (2E, 2E).
    w_out = jnp.concatenate([jnp.concatenate([p["v_wo"], z], axis=1),
                             jnp.concatenate([z, p["l_wo"]], axis=1)], axis=0)    # (64, 64)
    b_out = jnp.concatenate([p["v_bo"], p["l_bo"]], axis=1)                       # (1, 64)

    # Fusion RHS (2E, 6E) = [f_w1 | gate_w | I;I] (last block yields basic = wv + wl).
    eye = jnp.eye(E, dtype=f32)
    w_fuse = jnp.concatenate([p["f_w1"], p["gate_w"],
                              jnp.concatenate([eye, eye], axis=0)], axis=1)       # (64, 192)
    b_fuse = jnp.concatenate([p["f_b1"], p["gate_b"], jnp.zeros((1, E), f32)], axis=1)

    # Per-half averaging matrix for the two joint LayerNorms.
    ones_blk = jnp.full((E, E), 1.0 / E, f32)
    m_ln = jnp.concatenate([jnp.concatenate([ones_blk, z], axis=1),
                            jnp.concatenate([z, ones_blk], axis=1)], axis=0)      # (64, 64)

    # Head selector (scores) and head expander (PV); SCALE folded into the selector.
    lane_head = np.arange(E2) // D                                                # 0..15
    sel = jnp.asarray((np.equal.outer(lane_head, np.arange(H2)) * SCALE).astype(np.float32))  # (64,16)
    expand = jnp.asarray(np.equal.outer(np.arange(H2), lane_head).astype(np.float32))          # (16,64)

    # LayerNorm affines with the learned modality weights folded in at pack time.
    g_cat = jnp.concatenate([p["ln1_g"] * p["vw"], p["ln2_g"] * p["lw"]], axis=1)  # (1,64)
    b_cat = jnp.concatenate([p["ln1_b"] * p["vw"], p["ln2_b"] * p["lw"]], axis=1)  # (1,64)

    def row(x, width=6 * E):
        x = jnp.asarray(x, f32).reshape(1, -1)
        return jnp.pad(x, ((0, 0), (0, width - x.shape[1])))

    aux = jnp.concatenate([row(b_qkv), row(b_fuse), row(b_out), row(g_cat), row(b_cat),
                           row(p["ln3_g"]), row(p["ln3_b"]), row(p["f_b2"])], axis=0)  # (8,192)

    def pad_rows(x, rows=E2):
        return jnp.pad(x, ((0, rows - x.shape[0]), (0, 0)))

    slab = jnp.concatenate([w_qkv, w_out, w_fuse, m_ln, sel,
                            pad_rows(expand), pad_rows(aux)], axis=1)             # (64, 784)
    assert slab.shape == (E2, SLAB_COLS)

    # Constant same-batch key mask, layout (k, q, 1) so it lane-broadcasts over heads.
    kk, qq = np.meshgrid(np.arange(BS), np.arange(BS), indexing="ij")
    mask = jnp.asarray(((kk // SEQ) == (qq // SEQ)).astype(np.float32).reshape(BS, BS, 1))

    return slab, p["f_w2"], mask


# ----------------------------- wrapper -----------------------------
def adaptive_cross_modal_fusion(video, landmark, params):
    B, S, E = video.shape
    assert (B, S, E) == (BATCH, SEQ, EMBED_DIM)
    slab, f_w2, mask = pack_params(params)
    x_cat = jnp.concatenate([video.reshape(B * S, E), landmark.reshape(B * S, E)], axis=-1)

    vmem = pl.BlockSpec(memory_space=pltpu.MemorySpace.VMEM)
    out = pl.pallas_call(
        fusion_kernel,
        out_shape=jax.ShapeDtypeStruct((B * S, E), jnp.float32),
        in_specs=[vmem, vmem, vmem, vmem],   # x_cat, weight slab, f_w2, key mask
        out_specs=vmem,
    )(x_cat, slab, f_w2, mask)
    return out.reshape(B, S, E)
    # NOTE(v7x): for repeated invocations, batch several (video, landmark) pairs into one
    # call (grow B*S toward >=128 rows or add a "parallel" grid axis) to use both TCs.


# ----------------------------- pure-JAX reference -----------------------------
def _ref_mha(q_in, kv_in, wq, wk, wv, bq, bk, bv, wo, bo):
    B, S, E = q_in.shape
    Q = (q_in @ wq + bq).reshape(B, S, NUM_HEADS, HEAD_DIM).transpose(0, 2, 1, 3)
    K = (kv_in @ wk + bk).reshape(B, S, NUM_HEADS, HEAD_DIM).transpose(0, 2, 1, 3)
    V = (kv_in @ wv + bv).reshape(B, S, NUM_HEADS, HEAD_DIM).transpose(0, 2, 1, 3)
    scores = jnp.einsum("bhqd,bhkd->bhqk", Q, K) * SCALE
    p = jax.nn.softmax(scores, axis=-1)
    ctx = jnp.einsum("bhqk,bhkd->bhqd", p, V).transpose(0, 2, 1, 3).reshape(B, S, E)
    return ctx @ wo + bo


def _ref_ln(x, g, b):
    mu = jnp.mean(x, axis=-1, keepdims=True)
    var = jnp.mean((x - mu) ** 2, axis=-1, keepdims=True)
    return (x - mu) / jnp.sqrt(var + LN_EPS) * g + b


def reference(video, landmark, p):
    va = _ref_mha(video, landmark, p["v_wq"], p["v_wk"], p["v_wv"],
                  p["v_bq"], p["v_bk"], p["v_bv"], p["v_wo"], p["v_bo"])
    va = _ref_ln(video + va, p["ln1_g"], p["ln1_b"])
    la = _ref_mha(landmark, video, p["l_wq"], p["l_wk"], p["l_wv"],
                  p["l_bq"], p["l_bk"], p["l_bv"], p["l_wo"], p["l_bo"])
    la = _ref_ln(landmark + la, p["ln2_g"], p["ln2_b"])
    wv = va * p["vw"]
    wl = la * p["lw"]
    cat = jnp.concatenate([wv, wl], axis=-1)
    gate = jax.nn.sigmoid(cat @ p["gate_w"] + p["gate_b"])
    basic = wv + wl
    h1 = jax.nn.gelu(cat @ p["f_w1"] + p["f_b1"], approximate=False)
    enh = h1 @ p["f_w2"] + p["f_b2"]
    fused = gate * enh + (1.0 - gate) * basic
    return _ref_ln(fused, p["ln3_g"], p["ln3_b"])


# ----------------------------- parameter init -----------------------------
def make_params(key):
    E = EMBED_DIM
    keys = iter(jax.random.split(key, 32))

    def nrm(shape, scale=0.08):
        return (scale * jax.random.normal(next(keys), shape)).astype(jnp.float32)

    p = {}
    for pre in ("v", "l"):
        p[f"{pre}_wq"] = nrm((E, E)); p[f"{pre}_wk"] = nrm((E, E)); p[f"{pre}_wv"] = nrm((E, E))
        p[f"{pre}_bq"] = nrm((1, E)); p[f"{pre}_bk"] = nrm((1, E)); p[f"{pre}_bv"] = nrm((1, E))
        p[f"{pre}_wo"] = nrm((E, E)); p[f"{pre}_bo"] = nrm((1, E))
    for i in (1, 2, 3):
        p[f"ln{i}_g"] = jnp.ones((1, E), jnp.float32)
        p[f"ln{i}_b"] = jnp.zeros((1, E), jnp.float32)
    # learnable modality weights (init torch.ones(1); perturbed so the test exercises them)
    p["vw"] = (1.0 + 0.2 * jax.random.normal(next(keys), (1,))).astype(jnp.float32)
    p["lw"] = (1.0 + 0.2 * jax.random.normal(next(keys), (1,))).astype(jnp.float32)
    p["gate_w"] = nrm((2 * E, E)); p["gate_b"] = nrm((1, E))
    p["f_w1"] = nrm((2 * E, 4 * E)); p["f_b1"] = nrm((1, 4 * E))
    p["f_w2"] = nrm((4 * E, E));     p["f_b2"] = nrm((1, E))
    return p


# ----------------------------- main -----------------------------
if __name__ == "__main__":
    root = jax.random.PRNGKey(0)
    k_v, k_l, k_p = jax.random.split(root, 3)
    video = jax.random.normal(k_v, (BATCH, SEQ, EMBED_DIM), dtype=jnp.float32)
    landmark = jax.random.normal(k_l, (BATCH, SEQ, EMBED_DIM), dtype=jnp.float32)
    params = make_params(k_p)

    out = jax.block_until_ready(adaptive_cross_modal_fusion(video, landmark, params))
    ref = jax.block_until_ready(reference(video, landmark, params))
    np.testing.assert_allclose(np.asarray(out), np.asarray(ref), rtol=1e-4, atol=1e-4)

    print("KERNEL_OK")
</pallas_src>

<mosaic_0001>
module attributes {stable_mosaic.version = 11 : i64} {
  func.func @fusion_kernel(%arg0: memref<16x64xf32, #tpu.memory_space<vmem>>, %arg1: memref<64x784xf32, #tpu.memory_space<vmem>>, %arg2: memref<128x32xf32, #tpu.memory_space<vmem>>, %arg3: memref<16x16x1xf32, #tpu.memory_space<vmem>>, %arg4: memref<16x32xf32, #tpu.memory_space<vmem>>) attributes {dimension_semantics = [], scalar_prefetch = 0 : i64, scratch_operands = 0 : i64, tpu.core_type = #tpu.core_type<tc>} {
    %c0 = arith.constant 0 : index
    %c0_0 = arith.constant 0 : index
    %0 = vector.load %arg0[%c0, %c0_0] : memref<16x64xf32, #tpu.memory_space<vmem>>, vector<16x64xf32>
    %c0_1 = arith.constant 0 : index
    %c0_2 = arith.constant 0 : index
    %1 = vector.load %arg1[%c0_1, %c0_2] : memref<64x784xf32, #tpu.memory_space<vmem>>, vector<64x192xf32>
    %cst = arith.constant dense<0.000000e+00> : vector<16x192xf32>
    %2 = tpu.matmul %0, %1, %cst {dimension_numbers = #tpu.dot_dimension_numbers<[1], [0], [0], [1], [0, 0, 1, 1], [], []>} : vector<16x64xf32>, vector<64x192xf32>, vector<16x192xf32> -> vector<16x192xf32>
    %c0_3 = arith.constant 0 : index
    %c592 = arith.constant 592 : index
    %3 = vector.load %arg1[%c0_3, %c592] : memref<64x784xf32, #tpu.memory_space<vmem>>, vector<1x192xf32>
    %4 = vector.broadcast %3 : vector<1x192xf32> to vector<16x192xf32>
    %5 = arith.addf %2, %4 : vector<16x192xf32>
    %6 = vector.extract_strided_slice %5 {offsets = [0, 0], sizes = [16, 64], strides = [1, 1]} : vector<16x192xf32> to vector<16x64xf32>
    %7 = vector.extract_strided_slice %5 {offsets = [0, 64], sizes = [16, 64], strides = [1, 1]} : vector<16x192xf32> to vector<16x64xf32>
    %8 = vector.extract_strided_slice %5 {offsets = [0, 128], sizes = [16, 64], strides = [1, 1]} : vector<16x192xf32> to vector<16x64xf32>
    %9 = vector.shape_cast %7 : vector<16x64xf32> to vector<16x1x64xf32>
    %10 = vector.shape_cast %6 : vector<16x64xf32> to vector<1x16x64xf32>
    %11 = vector.broadcast %9 : vector<16x1x64xf32> to vector<16x16x64xf32>
    %12 = vector.broadcast %10 : vector<1x16x64xf32> to vector<16x16x64xf32>
    %13 = arith.mulf %11, %12 : vector<16x16x64xf32>
    %14 = vector.shape_cast %13 : vector<16x16x64xf32> to vector<256x64xf32>
    %c0_4 = arith.constant 0 : index
    %c512 = arith.constant 512 : index
    %15 = vector.load %arg1[%c0_4, %c512] : memref<64x784xf32, #tpu.memory_space<vmem>>, vector<64x16xf32>
    %cst_5 = arith.constant dense<0.000000e+00> : vector<256x16xf32>
    %16 = tpu.matmul %14, %15, %cst_5 {dimension_numbers = #tpu.dot_dimension_numbers<[1], [0], [0], [1], [0, 0, 1, 1], [], []>} : vector<256x64xf32>, vector<64x16xf32>, vector<256x16xf32> -> vector<256x16xf32>
    %17 = vector.shape_cast %16 : vector<256x16xf32> to vector<16x16x16xf32>
    %cst_6 = arith.constant dense<0xFF800000> : vector<16x16xf32>
    %18 = vector.multi_reduction <maximumf>, %17, %cst_6 [0] : vector<16x16x16xf32> to vector<16x16xf32>
    %19 = vector.shape_cast %18 : vector<16x16xf32> to vector<1x16x16xf32>
    %20 = vector.broadcast %19 : vector<1x16x16xf32> to vector<16x16x16xf32>
    %21 = arith.subf %17, %20 : vector<16x16x16xf32>
    %22 = math.exp %21 : vector<16x16x16xf32>
    %c0_7 = arith.constant 0 : index
    %c0_8 = arith.constant 0 : index
    %c0_9 = arith.constant 0 : index
    %23 = vector.load %arg3[%c0_7, %c0_8, %c0_9] : memref<16x16x1xf32, #tpu.memory_space<vmem>>, vector<16x16x1xf32>
    %24 = vector.broadcast %23 : vector<16x16x1xf32> to vector<16x16x16xf32>
    %25 = arith.mulf %22, %24 : vector<16x16x16xf32>
    %cst_10 = arith.constant dense<0.000000e+00> : vector<16x16xf32>
    %26 = vector.multi_reduction <add>, %25, %cst_10 [0] : vector<16x16x16xf32> to vector<16x16xf32>
    %27 = vector.shape_cast %26 : vector<16x16xf32> to vector<1x16x16xf32>
    %28 = vector.broadcast %27 : vector<1x16x16xf32> to vector<16x16x16xf32>
    %29 = arith.divf %25, %28 : vector<16x16x16xf32>
    %30 = vector.shape_cast %29 : vector<16x16x16xf32> to vector<256x16xf32>
    %c0_11 = arith.constant 0 : index
    %c528 = arith.constant 528 : index
    %31 = vector.load %arg1[%c0_11, %c528] : memref<64x784xf32, #tpu.memory_space<vmem>>, vector<16x64xf32>
    %cst_12 = arith.constant dense<0.000000e+00> : vector<256x64xf32>
    %32 = tpu.matmul %30, %31, %cst_12 {dimension_numbers = #tpu.dot_dimension_numbers<[1], [0], [0], [1], [0, 0, 1, 1], [], []>} : vector<256x16xf32>, vector<16x64xf32>, vector<256x64xf32> -> vector<256x64xf32>
    %33 = vector.shape_cast %32 : vector<256x64xf32> to vector<16x16x64xf32>
    %34 = vector.shape_cast %8 : vector<16x64xf32> to vector<16x1x64xf32>
    %35 = vector.broadcast %34 : vector<16x1x64xf32> to vector<16x16x64xf32>
    %36 = arith.mulf %33, %35 : vector<16x16x64xf32>
    %cst_13 = arith.constant dense<0.000000e+00> : vector<16x64xf32>
    %37 = vector.multi_reduction <add>, %36, %cst_13 [0] : vector<16x16x64xf32> to vector<16x64xf32>
    %c0_14 = arith.constant 0 : index
    %c192 = arith.constant 192 : index
    %38 = vector.load %arg1[%c0_14, %c192] : memref<64x784xf32, #tpu.memory_space<vmem>>, vector<64x64xf32>
    %cst_15 = arith.constant dense<0.000000e+00> : vector<16x64xf32>
    %39 = tpu.matmul %37, %38, %cst_15 {dimension_numbers = #tpu.dot_dimension_numbers<[1], [0], [0], [1], [0, 0, 1, 1], [], []>} : vector<16x64xf32>, vector<64x64xf32>, vector<16x64xf32> -> vector<16x64xf32>
    %c2 = arith.constant 2 : index
    %c592_16 = arith.constant 592 : index
    %40 = vector.load %arg1[%c2, %c592_16] : memref<64x784xf32, #tpu.memory_space<vmem>>, vector<1x64xf32>
    %41 = vector.broadcast %40 : vector<1x64xf32> to vector<16x64xf32>
    %42 = arith.addf %39, %41 : vector<16x64xf32>
    %43 = arith.addf %0, %42 : vector<16x64xf32>
    %c0_17 = arith.constant 0 : index
    %c448 = arith.constant 448 : index
    %44 = vector.load %arg1[%c0_17, %c448] : memref<64x784xf32, #tpu.memory_space<vmem>>, vector<64x64xf32>
    %cst_18 = arith.constant dense<0.000000e+00> : vector<16x64xf32>
    %45 = tpu.matmul %43, %44, %cst_18 {dimension_numbers = #tpu.dot_dimension_numbers<[1], [0], [0], [1], [0, 0, 1, 1], [], []>} : vector<16x64xf32>, vector<64x64xf32>, vector<16x64xf32> -> vector<16x64xf32>
    %46 = arith.mulf %43, %43 : vector<16x64xf32>
    %cst_19 = arith.constant dense<0.000000e+00> : vector<16x64xf32>
    %47 = tpu.matmul %46, %44, %cst_19 {dimension_numbers = #tpu.dot_dimension_numbers<[1], [0], [0], [1], [0, 0, 1, 1], [], []>} : vector<16x64xf32>, vector<64x64xf32>, vector<16x64xf32> -> vector<16x64xf32>
    %48 = arith.subf %43, %45 : vector<16x64xf32>
    %49 = arith.mulf %45, %45 : vector<16x64xf32>
    %50 = arith.subf %47, %49 : vector<16x64xf32>
    %cst_20 = arith.constant 9.99999974E-6 : f32
    %51 = vector.broadcast %cst_20 : f32 to vector<16x64xf32>
    %52 = arith.addf %50, %51 : vector<16x64xf32>
    %53 = math.rsqrt %52 : vector<16x64xf32>
    %54 = arith.mulf %48, %53 : vector<16x64xf32>
    %c3 = arith.constant 3 : index
    %c592_21 = arith.constant 592 : index
    %55 = vector.load %arg1[%c3, %c592_21] : memref<64x784xf32, #tpu.memory_space<vmem>>, vector<1x64xf32>
    %56 = vector.broadcast %55 : vector<1x64xf32> to vector<16x64xf32>
    %57 = arith.mulf %54, %56 : vector<16x64xf32>
    %c4 = arith.constant 4 : index
    %c592_22 = arith.constant 592 : index
    %58 = vector.load %arg1[%c4, %c592_22] : memref<64x784xf32, #tpu.memory_space<vmem>>, vector<1x64xf32>
    %59 = vector.broadcast %58 : vector<1x64xf32> to vector<16x64xf32>
    %60 = arith.addf %57, %59 : vector<16x64xf32>
    %c0_23 = arith.constant 0 : index
    %c256 = arith.constant 256 : index
    %61 = vector.load %arg1[%c0_23, %c256] : memref<64x784xf32, #tpu.memory_space<vmem>>, vector<64x192xf32>
    %cst_24 = arith.constant dense<0.000000e+00> : vector<16x192xf32>
    %62 = tpu.matmul %60, %61, %cst_24 {dimension_numbers = #tpu.dot_dimension_numbers<[1], [0], [0], [1], [0, 0, 1, 1], [], []>} : vector<16x64xf32>, vector<64x192xf32>, vector<16x192xf32> -> vector<16x192xf32>
    %c1 = arith.constant 1 : index
    %c592_25 = arith.constant 592 : index
    %63 = vector.load %arg1[%c1, %c592_25] : memref<64x784xf32, #tpu.memory_space<vmem>>, vector<1x192xf32>
    %64 = vector.broadcast %63 : vector<1x192xf32> to vector<16x192xf32>
    %65 = arith.addf %62, %64 : vector<16x192xf32>
    %66 = vector.extract_strided_slice %65 {offsets = [0, 0], sizes = [16, 128], strides = [1, 1]} : vector<16x192xf32> to vector<16x128xf32>
    %cst_26 = arith.constant 5.000000e-01 : f32
    %67 = vector.broadcast %cst_26 : f32 to vector<16x128xf32>
    %68 = arith.mulf %67, %66 : vector<16x128xf32>
    %cst_27 = arith.constant 0.707106769 : f32
    %69 = vector.broadcast %cst_27 : f32 to vector<16x128xf32>
    %70 = arith.mulf %66, %69 : vector<16x128xf32>
    %71 = math.erf %70 : vector<16x128xf32>
    %cst_28 = arith.constant 1.000000e+00 : f32
    %72 = vector.broadcast %cst_28 : f32 to vector<16x128xf32>
    %73 = arith.addf %72, %71 : vector<16x128xf32>
    %74 = arith.mulf %68, %73 : vector<16x128xf32>
    %75 = vector.extract_strided_slice %65 {offsets = [0, 128], sizes = [16, 32], strides = [1, 1]} : vector<16x192xf32> to vector<16x32xf32>
    %76 = arith.negf %75 : vector<16x32xf32>
    %77 = math.exp %76 : vector<16x32xf32>
    %cst_29 = arith.constant 1.000000e+00 : f32
    %78 = vector.broadcast %cst_29 : f32 to vector<16x32xf32>
    %79 = arith.addf %78, %77 : vector<16x32xf32>
    %80 = arith.divf %78, %79 : vector<16x32xf32>
    %81 = vector.extract_strided_slice %65 {offsets = [0, 160], sizes = [16, 32], strides = [1, 1]} : vector<16x192xf32> to vector<16x32xf32>
    %c0_30 = arith.constant 0 : index
    %c0_31 = arith.constant 0 : index
    %82 = vector.load %arg2[%c0_30, %c0_31] : memref<128x32xf32, #tpu.memory_space<vmem>>, vector<128x32xf32>
    %cst_32 = arith.constant dense<0.000000e+00> : vector<16x32xf32>
    %83 = tpu.matmul %74, %82, %cst_32 {dimension_numbers = #tpu.dot_dimension_numbers<[1], [0], [0], [1], [0, 0, 1, 1], [], []>} : vector<16x128xf32>, vector<128x32xf32>, vector<16x32xf32> -> vector<16x32xf32>
    %c7 = arith.constant 7 : index
    %c592_33 = arith.constant 592 : index
    %84 = vector.load %arg1[%c7, %c592_33] : memref<64x784xf32, #tpu.memory_space<vmem>>, vector<1x32xf32>
    %85 = vector.broadcast %84 : vector<1x32xf32> to vector<16x32xf32>
    %86 = arith.addf %83, %85 : vector<16x32xf32>
    %87 = arith.mulf %80, %86 : vector<16x32xf32>
    %cst_34 = arith.constant 1.000000e+00 : f32
    %88 = vector.broadcast %cst_34 : f32 to vector<16x32xf32>
    %89 = arith.subf %88, %80 : vector<16x32xf32>
    %90 = arith.mulf %89, %81 : vector<16x32xf32>
    %91 = arith.addf %87, %90 : vector<16x32xf32>
    %cst_35 = arith.constant dense<0.000000e+00> : vector<16xf32>
    %92 = vector.multi_reduction <add>, %91, %cst_35 [1] : vector<16x32xf32> to vector<16xf32>
    %93 = vector.shape_cast %92 : vector<16xf32> to vector<16x1xf32>
    %cst_36 = arith.constant 3.200000e+01 : f32
    %94 = vector.broadcast %cst_36 : f32 to vector<16x1xf32>
    %95 = arith.divf %93, %94 : vector<16x1xf32>
    %96 = vector.broadcast %95 : vector<16x1xf32> to vector<16x32xf32>
    %97 = arith.subf %91, %96 : vector<16x32xf32>
    %98 = arith.mulf %97, %97 : vector<16x32xf32>
    %cst_37 = arith.constant dense<0.000000e+00> : vector<16xf32>
    %99 = vector.multi_reduction <add>, %98, %cst_37 [1] : vector<16x32xf32> to vector<16xf32>
    %100 = vector.shape_cast %99 : vector<16xf32> to vector<16x1xf32>
    %cst_38 = arith.constant 3.200000e+01 : f32
    %101 = vector.broadcast %cst_38 : f32 to vector<16x1xf32>
    %102 = arith.divf %100, %101 : vector<16x1xf32>
    %103 = vector.broadcast %95 : vector<16x1xf32> to vector<16x32xf32>
    %104 = arith.subf %91, %103 : vector<16x32xf32>
    %cst_39 = arith.constant 9.99999974E-6 : f32
    %105 = vector.broadcast %cst_39 : f32 to vector<16x1xf32>
    %106 = arith.addf %102, %105 : vector<16x1xf32>
    %107 = math.rsqrt %106 : vector<16x1xf32>
    %108 = vector.broadcast %107 : vector<16x1xf32> to vector<16x32xf32>
    %109 = arith.mulf %104, %108 : vector<16x32xf32>
    %c5 = arith.constant 5 : index
    %c592_40 = arith.constant 592 : index
    %110 = vector.load %arg1[%c5, %c592_40] : memref<64x784xf32, #tpu.memory_space<vmem>>, vector<1x32xf32>
    %111 = vector.broadcast %110 : vector<1x32xf32> to vector<16x32xf32>
    %112 = arith.mulf %109, %111 : vector<16x32xf32>
    %c6 = arith.constant 6 : index
    %c592_41 = arith.constant 592 : index
    %113 = vector.load %arg1[%c6, %c592_41] : memref<64x784xf32, #tpu.memory_space<vmem>>, vector<1x32xf32>
    %114 = vector.broadcast %113 : vector<1x32xf32> to vector<16x32xf32>
    %115 = arith.addf %112, %114 : vector<16x32xf32>
    %c0_42 = arith.constant 0 : index
    %c0_43 = arith.constant 0 : index
    %116 = vector.load %arg4[%c0_42, %c0_43] : memref<16x32xf32, #tpu.memory_space<vmem>>, vector<16x32xf32>
    tpu.vector_store %arg4[%c0_42, %c0_43], %115 {strides = array<i32>} : memref<16x32xf32, #tpu.memory_space<vmem>>, vector<16x32xf32>,
    return
  }
}

</mosaic_0001>

<llo_original>
// kernel: tpu_custom_call.1
$region0: #{tpu_custom_call.1}
  #allocation0 [shape = 'u32[]', space=smem, size = 0x4, offset = 0x4, fixed_abs, tag = 'smem constant byte address 0x4 - core index']
  #allocation1 [shape = 'u32[144,128]{1,0:T(1,128)}', space=vmem, size = 0x12000, scoped, tag = 'internal scratch']
  %s0 = inlined_call_operand.vmem [shape: f32[16,64], index: 0, kind: input, shape index: {}]
  %s1 = inlined_call_operand.hbm [shape: f32[64,784], index: 1, kind: input, shape index: {}]
  %s2 = inlined_call_operand.vmem [shape: f32[128,32], index: 2, kind: input, shape index: {}]
  %s3 = inlined_call_operand.vmem [shape: f32[16,16,1], index: 3, kind: input, shape index: {}]
  %s4 = inlined_call_operand.hbm [shape: f32[16,32], index: 4, kind: output, shape index: {}]
  %s5 = sld [smem:[#allocation0]]
  $region30: #{tpu_custom_call.1} parent=0
    _
  %s7 = ssub.s32 1, %s5
  %s8 = scalar_select 0, %s7, %s5
  $region1: #{tpu_custom_call.1} parent=0
    #allocation2 [shape = 'u8[229376]{0}', space=vmem, size = 0x38000, scoped, tag = 'input window, operand 1, single buffered']
    #allocation3 [shape = 's32[1]{0}', space=sflag, size = 0x4, scoped, tag = 'scoped memory for tpu_custom_call.1']
    #allocation4 [shape = 's32[1]{0}', space=sflag, size = 0x4, scoped, tag = 'scoped memory for tpu_custom_call.1']
    #allocation5 [shape = 'u8[8192]{0}', space=vmem, size = 0x2000, scoped, tag = 'output window, operand 0, single buffered']
    %9 = vsyncpa [#allocation3], 0
    %10 = vsyncpa [#allocation4], 0
    // Predicated region
    $region2: #{tpu_custom_call.1} parent=1 // pred_check
      _
    $region3: #{tpu_custom_call.1} parent=1 // pred_check_branch
      %12 = sbr.rel (0) target = $region5
    $region4: #{tpu_custom_call.1} parent=1 // pred_region
      _
    $region5: #{tpu_custom_call.1} parent=1 // pred_fallthru
      _
    // Predicated region
    $region6: #{tpu_custom_call.1} parent=1 // pred_check
      _
    $region7: #{tpu_custom_call.1} parent=1 // pred_check_branch
      %14 = sbr.rel (0) target = $region9
    $region8: #{tpu_custom_call.1} parent=1 // pred_region
      %s16 = ssub.s32 7168, 7168
      %17 = vsyncadd [#allocation3], %s16
      %s18 = sshll.u32 [#allocation2], 4
      %s19 = int_to_ptr.vmem [resolvable:$true] %s18
      %24 = dma.hbm_to_vmem [thread:$0]  %s1, 7168, %s19, [#allocation3], 896, 896, 56
    $region9: #{tpu_custom_call.1} parent=1 // pred_fallthru
      _
    // Predicated region
    $region10: #{tpu_custom_call.1} parent=1 // pred_check
      _
    $region11: #{tpu_custom_call.1} parent=1 // pred_check_branch
      %26 = sbr.rel (0) target = $region13
    $region12: #{tpu_custom_call.1} parent=1 // pred_region
      _
    $region13: #{tpu_custom_call.1} parent=1 // pred_fallthru
      _
    // Predicated region
    $region14: #{tpu_custom_call.1} parent=1 // pred_check
      _
    $region15: #{tpu_custom_call.1} parent=1 // pred_check_branch
      %28 = sbr.rel (0) target = $region17
    $region16: #{tpu_custom_call.1} parent=1 // pred_region
      _
    $region17: #{tpu_custom_call.1} parent=1 // pred_fallthru
      _
    // Predicated region
    $region18: #{tpu_custom_call.1} parent=1 // pred_check
      _
    $region19: #{tpu_custom_call.1} parent=1 // pred_check_branch
      %30 = sbr.rel (0) target = $region21
    $region20: #{tpu_custom_call.1} parent=1 // pred_region
      %31 = dma.done [#allocation3], 7168
    $region21: #{tpu_custom_call.1} parent=1 // pred_fallthru
      _
    %v32 = vld [vmem:[%s0] sm:$0xff]
    %v33 = vld [vmem:[%s0 + $0x8] sm:$0xff]
    %v34 = vld [vmem:[#allocation2] sm:$0xff]
    %v35 = vld [vmem:[#allocation2 + $0x8] sm:$0xff]
    %v36 = vld [vmem:[#allocation2 + $0x38] sm:$0xff]
    %v37 = vld [vmem:[#allocation2 + $0x40] sm:$0xff]
    %v38 = vld [vmem:[#allocation2 + $0x70] sm:$0xff]
    %v39 = vld [vmem:[#allocation2 + $0x78] sm:$0xff]
    %v40 = vld [vmem:[#allocation2 + $0xa8] sm:$0xff]
    %v41 = vld [vmem:[#allocation2 + $0xb0] sm:$0xff]
    %v42 = vld [vmem:[#allocation2 + $0xe0] sm:$0xff]
    %v43 = vld [vmem:[#allocation2 + $0xe8] sm:$0xff]
    %v44 = vld [vmem:[#allocation2 + $0x118] sm:$0xff]
    %v45 = vld [vmem:[#allocation2 + $0x120] sm:$0xff]
    %v46 = vld [vmem:[#allocation2 + $0x150] sm:$0xff]
    %v47 = vld [vmem:[#allocation2 + $0x158] sm:$0xff]
    %v48 = vld [vmem:[#allocation2 + $0x188] sm:$0xff]
    %v49 = vld [vmem:[#allocation2 + $0x190] sm:$0xff]
    %s50 = scalar_lea.vmem [#allocation2], 32
    %v51 = vld [vmem:[%s50] ss:$8 sm:$0x7]
    %v53 = vlaneseq
    %v54 = vshrl.u32 %v53, 7
    %v55 = vsub.s32 0, %v54
    %v56 = vrot.slane %v51, %v55
    %v57 = vlaneseq
    %v58 = vshrl.u32 %v57, 7
    %v59 = vsub.s32 1, %v58
    %v60 = vrot.slane %v51, %v59
    %v61 = vlaneseq
    %v62 = vshrl.u32 %v61, 7
    %v63 = vsub.s32 2, %v62
    %v64 = vrot.slane %v51, %v63
    %65 = vrot.lane.b32.xlu0 %v56, 48
    %v66 = vpop.permute.xlu0 %65
    %67 = vrot.lane.b32.xlu0 %v60, 48
    %v68 = vpop.permute.xlu0 %67
    %69 = vrot.lane.b32.xlu0 %v64, 48
    %v70 = vpop.permute.xlu0 %69
    %vm71 = vcmask 392192
    %v72 = vsel %vm71, %v66, %v68
    %v73 = vsel %vm71, %v68, %v70
    %vm76 = vcmask 523264
    %v78 = vsel %vm76, %v32, 0
    %v81 = vsel %vm76, %v33, 0
    %83 = vmatprep.subr.mxu0 0.0
    %84 = vmatpush1.msra.mxu0 0.0
    %85 = vmatprep.subr.mxu0 0.0
    %86 = vmatpush1.msra.mxu0 0.0
    %87 = vmatprep.subr.mxu0 0.0
    %88 = vmatpush1.msra.mxu0 0.0
    %89 = vmatprep.subr.mxu0 0.0
    %90 = vmatpush1.msra.mxu0 0.0
    %91 = vmatprep.subr.mxu0 0.0
    %92 = vmatpush1.msra.mxu0 0.0
    %93 = vmatprep.subr.mxu0 0.0
    %94 = vmatpush1.msra.mxu0 0.0
    %95 = vmatprep.subr.mxu0 0.0
    %96 = vmatpush1.msra.mxu0 0.0
    %97 = vmatprep.subr.mxu0 0.0
    %98 = vmatpush1.msra.mxu0 0.0
    %99 = vmatprep.subr.mxu0 %v49
    %100 = vmatpush1.msra.mxu0 %v48
    %101 = vmatprep.subr.mxu0 %v47
    %102 = vmatpush1.msra.mxu0 %v46
    %103 = vmatprep.subr.mxu0 %v45
    %104 = vmatpush1.msra.mxu0 %v44
    %105 = vmatprep.subr.mxu0 %v43
    %106 = vmatpush1.msra.mxu0 %v42
    %107 = vmatprep.subr.mxu0 %v41
    %108 = vmatpush1.msra.mxu0 %v40
    %109 = vmatprep.subr.mxu0 %v39
    %110 = vmatpush1.msra.mxu0 %v38
    %111 = vmatprep.subr.mxu0 %v37
    %112 = vmatpush1.msra.mxu0 %v36
    %113 = vmatprep.subr.mxu0 %v35
    %114 = vmatpush1.msra.mxu0 %v34
    %115 = vmatprep.subr.mxu0 0.0
    %116 = vmatpush2.msra.mxu0 0.0
    %117 = vmatprep.subr.mxu0 0.0
    %118 = vmatpush2.msra.mxu0 0.0
    %119 = vmatprep.subr.mxu0 0.0
    %120 = vmatpush2.msra.mxu0 0.0
    %121 = vmatprep.subr.mxu0 0.0
    %122 = vmatpush2.msra.mxu0 0.0
    %123 = vmatprep.subr.mxu0 0.0
    %124 = vmatpush2.msra.mxu0 0.0
    %125 = vmatprep.subr.mxu0 0.0
    %126 = vmatpush2.msra.mxu0 0.0
    %127 = vmatprep.subr.mxu0 0.0
    %128 = vmatpush2.msra.mxu0 0.0
    %129 = vmatprep.subr.mxu0 0.0
    %130 = vmatpush2.msra.mxu0 0.0
    %131 = vmatprep.subr.mxu0 0.0
    %132 = vmatpush2.msra.mxu0 0.0
    %133 = vmatprep.subr.mxu0 0.0
    %134 = vmatpush2.msra.mxu0 0.0
    %135 = vmatprep.subr.mxu0 0.0
    %136 = vmatpush2.msra.mxu0 0.0
    %137 = vmatprep.subr.mxu0 0.0
    %138 = vmatpush2.msra.mxu0 0.0
    %139 = vmatprep.subr.mxu0 0.0
    %140 = vmatpush2.msra.mxu0 0.0
    %141 = vmatprep.subr.mxu0 0.0
    %142 = vmatpush2.msra.mxu0 0.0
    %143 = vmatprep.subr.mxu0 0.0
    %144 = vmatpush2.msra.mxu0 0.0
    %145 = vmatprep.subr.mxu0 0.0
    %146 = vmatpush2.msra.mxu0 0.0
    %147 = vmatprep.mubr.f32.mxu0 0.0
    %148 = vmatmul.mubr.f32.gmra.mxu0 %v78
    %v149 = vpop.f32.mrf.mxu0
    %v150 = vadd.f32 %v72, %v149
    %v151 = vpop.f32.mrf.mxu0
    %v152 = vadd.f32 %v73, %v151
    %153 = vmatprep.mubr.f32.mxu0 0.0
    %154 = vmatmul.mubr.f32.gmra.mxu0 %v81
    %v155 = vpop.f32.mrf.mxu0
    %v156 = vadd.f32 %v72, %v155
    %v157 = vpop.f32.mrf.mxu0
    %v158 = vadd.f32 %v73, %v157
    %159 = vdwg.mxu0
    %v162 = vcombine.high %v150, %v150
    %v164 = vunpack.c.l.s4 1966171168
    %v165 = vunpack.c.0.s8 %v164
    %v166 = vlaneseq
    %v167 = vshrl.u32 %v166, 7
    %v168 = vsub.s32 %v165, %v167
    %v169 = vrot.slane %v150, %v168
    %v171 = vunpack.c.l.s4 1966171168
    %v172 = vunpack.c.0.s8 %v171
    %v173 = vlaneseq
    %v174 = vshrl.u32 %v173, 7
    %v175 = vsub.s32 %v172, %v174
    %v176 = vrot.slane %v162, %v175
    %v177 = vcombine.high %v169, %v169
    %v178 = vcombine.high %v176, %v176
    %v180 = vunpack.c.l.s4 1966171168
    %v181 = vunpack.c.0.s8 %v180
    %v182 = vlaneseq
    %v183 = vshrl.u32 %v182, 7
    %v184 = vsub.s32 %v181, %v183
    %v185 = vrot.slane %v169, %v184
    %v187 = vunpack.c.l.s4 1966171168
    %v188 = vunpack.c.0.s8 %v187
    %v189 = vlaneseq
    %v190 = vshrl.u32 %v189, 7
    %v191 = vsub.s32 %v188, %v190
    %v192 = vrot.slane %v176, %v191
    %v194 = vunpack.c.l.s4 1966171168
    %v195 = vunpack.c.0.s8 %v194
    %v196 = vlaneseq
    %v197 = vshrl.u32 %v196, 7
    %v198 = vsub.s32 %v195, %v197
    %v199 = vrot.slane %v177, %v198
    %v201 = vunpack.c.l.s4 1966171168
    %v202 = vunpack.c.0.s8 %v201
    %v203 = vlaneseq
    %v204 = vshrl.u32 %v203, 7
    %v205 = vsub.s32 %v202, %v204
    %v206 = vrot.slane %v178, %v205
    %v207 = vcombine.high %v185, %v185
    %v208 = vcombine.high %v192, %v192
    %v209 = vcombine.high %v199, %v199
    %v210 = vcombine.high %v206, %v206
    %v211 = vcombine.high %v156, %v156
    %v213 = vunpack.c.l.s4 1966171168
    %v214 = vunpack.c.0.s8 %v213
    %v215 = vlaneseq
    %v216 = vshrl.u32 %v215, 7
    %v217 = vsub.s32 %v214, %v216
    %v218 = vrot.slane %v156, %v217
    %v220 = vunpack.c.l.s4 1966171168
    %v221 = vunpack.c.0.s8 %v220
    %v222 = vlaneseq
    %v223 = vshrl.u32 %v222, 7
    %v224 = vsub.s32 %v221, %v223
    %v225 = vrot.slane %v211, %v224
    %v226 = vcombine.high %v218, %v218
    %v227 = vcombine.high %v225, %v225
    %v229 = vunpack.c.l.s4 1966171168
    %v230 = vunpack.c.0.s8 %v229
    %v231 = vlaneseq
    %v232 = vshrl.u32 %v231, 7
    %v233 = vsub.s32 %v230, %v232
    %v234 = vrot.slane %v218, %v233
    %v236 = vunpack.c.l.s4 1966171168
    %v237 = vunpack.c.0.s8 %v236
    %v238 = vlaneseq
    %v239 = vshrl.u32 %v238, 7
    %v240 = vsub.s32 %v237, %v239
    %v241 = vrot.slane %v225, %v240
    %v243 = vunpack.c.l.s4 1966171168
    %v244 = vunpack.c.0.s8 %v243
    %v245 = vlaneseq
    %v246 = vshrl.u32 %v245, 7
    %v247 = vsub.s32 %v244, %v246
    %v248 = vrot.slane %v226, %v247
    %v250 = vunpack.c.l.s4 1966171168
    %v251 = vunpack.c.0.s8 %v250
    %v252 = vlaneseq
    %v253 = vshrl.u32 %v252, 7
    %v254 = vsub.s32 %v251, %v253
    %v255 = vrot.slane %v227, %v254
    %v256 = vcombine.high %v234, %v234
    %v257 = vcombine.high %v241, %v241
    %v258 = vcombine.high %v248, %v248
    %v259 = vcombine.high %v255, %v255
    %v260 = vlaneseq
    %v261 = vshrl.u32 %v260, 7
    %v262 = vsub.s32 0, %v261
    %v263 = vrot.slane %v185, %v262
    %v264 = vlaneseq
    %v265 = vshrl.u32 %v264, 7
    %v266 = vsub.s32 0, %v265
    %v267 = vrot.slane %v199, %v266
    %v268 = vlaneseq
    %v269 = vshrl.u32 %v268, 7
    %v270 = vsub.s32 0, %v269
    %v271 = vrot.slane %v207, %v270
    %v272 = vlaneseq
    %v273 = vshrl.u32 %v272, 7
    %v274 = vsub.s32 0, %v273
    %v275 = vrot.slane %v209, %v274
    %v276 = vlaneseq
    %v277 = vshrl.u32 %v276, 7
    %v278 = vsub.s32 0, %v277
    %v279 = vrot.slane %v192, %v278
    %v280 = vlaneseq
    %v281 = vshrl.u32 %v280, 7
    %v282 = vsub.s32 0, %v281
    %v283 = vrot.slane %v206, %v282
    %v284 = vlaneseq
    %v285 = vshrl.u32 %v284, 7
    %v286 = vsub.s32 0, %v285
    %v287 = vrot.slane %v208, %v286
    %v288 = vlaneseq
    %v289 = vshrl.u32 %v288, 7
    %v290 = vsub.s32 0, %v289
    %v291 = vrot.slane %v210, %v290
    %v292 = vlaneseq
    %v293 = vshrl.u32 %v292, 7
    %v294 = vsub.s32 0, %v293
    %v295 = vrot.slane %v234, %v294
    %v296 = vlaneseq
    %v297 = vshrl.u32 %v296, 7
    %v298 = vsub.s32 0, %v297
    %v299 = vrot.slane %v248, %v298
    %v300 = vlaneseq
    %v301 = vshrl.u32 %v300, 7
    %v302 = vsub.s32 0, %v301
    %v303 = vrot.slane %v256, %v302
    %v304 = vlaneseq
    %v305 = vshrl.u32 %v304, 7
    %v306 = vsub.s32 0, %v305
    %v307 = vrot.slane %v258, %v306
    %v308 = vlaneseq
    %v309 = vshrl.u32 %v308, 7
    %v310 = vsub.s32 0, %v309
    %v311 = vrot.slane %v241, %v310
    %v312 = vlaneseq
    %v313 = vshrl.u32 %v312, 7
    %v314 = vsub.s32 0, %v313
    %v315 = vrot.slane %v255, %v314
    %v316 = vlaneseq
    %v317 = vshrl.u32 %v316, 7
    %v318 = vsub.s32 0, %v317
    %v319 = vrot.slane %v257, %v318
    %v320 = vlaneseq
    %v321 = vshrl.u32 %v320, 7
    %v322 = vsub.s32 0, %v321
    %v323 = vrot.slane %v259, %v322
    %340 = vrot.lane.b32.xlu0 %v150, 64
    %v341 = vpop.permute.xlu0 %340
    %342 = vrot.lane.b32.xlu0 %v156, 64
    %v343 = vpop.permute.xlu0 %342
    %v346 = vmul.f32 %v263, %v341
    %v347 = vmul.f32 %v263, %v343
    %v348 = vmul.f32 %v267, %v341
    %v349 = vmul.f32 %v267, %v343
    %v350 = vmul.f32 %v271, %v341
    %v351 = vmul.f32 %v271, %v343
    %v352 = vmul.f32 %v275, %v341
    %v353 = vmul.f32 %v275, %v343
    %v354 = vmul.f32 %v279, %v341
    %v355 = vmul.f32 %v279, %v343
    %v356 = vmul.f32 %v283, %v341
    %v357 = vmul.f32 %v283, %v343
    %v358 = vmul.f32 %v287, %v341
    %v359 = vmul.f32 %v287, %v343
    %v360 = vmul.f32 %v291, %v341
    %v361 = vmul.f32 %v291, %v343
    %v362 = vmul.f32 %v295, %v341
    %v363 = vmul.f32 %v295, %v343
    %v364 = vmul.f32 %v299, %v341
    %v365 = vmul.f32 %v299, %v343
    %v366 = vmul.f32 %v303, %v341
    %v367 = vmul.f32 %v303, %v343
    %v368 = vmul.f32 %v307, %v341
    %v369 = vmul.f32 %v307, %v343
    %v370 = vmul.f32 %v311, %v341
    %v371 = vmul.f32 %v311, %v343
    %v372 = vmul.f32 %v315, %v341
    %v373 = vmul.f32 %v315, %v343
    %v374 = vmul.f32 %v319, %v341
    %v375 = vmul.f32 %v319, %v343
    %v376 = vmul.f32 %v323, %v341
    %v377 = vmul.f32 %v323, %v343
    %v378 = vld [vmem:[#allocation2 + $0x20] sm:$0xff]
    %v379 = vld [vmem:[#allocation2 + $0x58] sm:$0xff]
    %v380 = vld [vmem:[#allocation2 + $0x90] sm:$0xff]
    %v381 = vld [vmem:[#allocation2 + $0xc8] sm:$0xff]
    %v382 = vld [vmem:[#allocation2 + $0x100] sm:$0xff]
    %v383 = vld [vmem:[#allocation2 + $0x138] sm:$0xff]
    %v384 = vld [vmem:[#allocation2 + $0x170] sm:$0xff]
    %v385 = vld [vmem:[#allocation2 + $0x1a8] sm:$0xff]
    %418 = vrot.lane.b32.xlu0 %v346, 64
    %v419 = vpop.permute.xlu0 %418
    %420 = vrot.lane.b32.xlu0 %v347, 64
    %v421 = vpop.permute.xlu0 %420
    %422 = vrot.lane.b32.xlu0 %v348, 64
    %v423 = vpop.permute.xlu0 %422
    %424 = vrot.lane.b32.xlu0 %v349, 64
    %v425 = vpop.permute.xlu0 %424
    %426 = vrot.lane.b32.xlu0 %v350, 64
    %v427 = vpop.permute.xlu0 %426
    %428 = vrot.lane.b32.xlu0 %v351, 64
    %v429 = vpop.permute.xlu0 %428
    %430 = vrot.lane.b32.xlu0 %v352, 64
    %v431 = vpop.permute.xlu0 %430
    %432 = vrot.lane.b32.xlu0 %v353, 64
    %v433 = vpop.permute.xlu0 %432
    %434 = vrot.lane.b32.xlu0 %v354, 64
    %v435 = vpop.permute.xlu0 %434
    %436 = vrot.lane.b32.xlu0 %v355, 64
    %v437 = vpop.permute.xlu0 %436
    %438 = vrot.lane.b32.xlu0 %v356, 64
    %v439 = vpop.permute.xlu0 %438
    %440 = vrot.lane.b32.xlu0 %v357, 64
    %v441 = vpop.permute.xlu0 %440
    %442 = vrot.lane.b32.xlu0 %v358, 64
    %v443 = vpop.permute.xlu0 %442
    %444 = vrot.lane.b32.xlu0 %v359, 64
    %v445 = vpop.permute.xlu0 %444
    %446 = vrot.lane.b32.xlu0 %v360, 64
    %v447 = vpop.permute.xlu0 %446
    %448 = vrot.lane.b32.xlu0 %v361, 64
    %v449 = vpop.permute.xlu0 %448
    %450 = vrot.lane.b32.xlu0 %v362, 64
    %v451 = vpop.permute.xlu0 %450
    %452 = vrot.lane.b32.xlu0 %v363, 64
    %v453 = vpop.permute.xlu0 %452
    %454 = vrot.lane.b32.xlu0 %v364, 64
    %v455 = vpop.permute.xlu0 %454
    %456 = vrot.lane.b32.xlu0 %v365, 64
    %v457 = vpop.permute.xlu0 %456
    %458 = vrot.lane.b32.xlu0 %v366, 64
    %v459 = vpop.permute.xlu0 %458
    %460 = vrot.lane.b32.xlu0 %v367, 64
    %v461 = vpop.permute.xlu0 %460
    %462 = vrot.lane.b32.xlu0 %v368, 64
    %v463 = vpop.permute.xlu0 %462
    %464 = vrot.lane.b32.xlu0 %v369, 64
    %v465 = vpop.permute.xlu0 %464
    %466 = vrot.lane.b32.xlu0 %v370, 64
    %v467 = vpop.permute.xlu0 %466
    %468 = vrot.lane.b32.xlu0 %v371, 64
    %v469 = vpop.permute.xlu0 %468
    %470 = vrot.lane.b32.xlu0 %v372, 64
    %v471 = vpop.permute.xlu0 %470
    %472 = vrot.lane.b32.xlu0 %v373, 64
    %v473 = vpop.permute.xlu0 %472
    %474 = vrot.lane.b32.xlu0 %v374, 64
    %v475 = vpop.permute.xlu0 %474
    %476 = vrot.lane.b32.xlu0 %v375, 64
    %v477 = vpop.permute.xlu0 %476
    %478 = vrot.lane.b32.xlu0 %v376, 64
    %v479 = vpop.permute.xlu0 %478
    %480 = vrot.lane.b32.xlu0 %v377, 64
    %v481 = vpop.permute.xlu0 %480
    %v482 = vsel %vm76, %v419, 0
    %v484 = vsel %vm76, %v421, 0
    %v486 = vsel %vm76, %v423, 0
    %v488 = vsel %vm76, %v425, 0
    %v490 = vsel %vm76, %v427, 0
    %v492 = vsel %vm76, %v429, 0
    %v494 = vsel %vm76, %v431, 0
    %v496 = vsel %vm76, %v433, 0
    %v498 = vsel %vm76, %v435, 0
    %v500 = vsel %vm76, %v437, 0
    %v502 = vsel %vm76, %v439, 0
    %v504 = vsel %vm76, %v441, 0
    %v506 = vsel %vm76, %v443, 0
    %v508 = vsel %vm76, %v445, 0
    %v510 = vsel %vm76, %v447, 0
    %v512 = vsel %vm76, %v449, 0
    %v514 = vsel %vm76, %v451, 0
    %v516 = vsel %vm76, %v453, 0
    %v518 = vsel %vm76, %v455, 0
    %v520 = vsel %vm76, %v457, 0
    %v522 = vsel %vm76, %v459, 0
    %v524 = vsel %vm76, %v461, 0
    %v526 = vsel %vm76, %v463, 0
    %v528 = vsel %vm76, %v465, 0
    %v530 = vsel %vm76, %v467, 0
    %v532 = vsel %vm76, %v469, 0
    %v534 = vsel %vm76, %v471, 0
    %v536 = vsel %vm76, %v473, 0
    %v538 = vsel %vm76, %v475, 0
    %v540 = vsel %vm76, %v477, 0
    %v542 = vsel %vm76, %v479, 0
    %v544 = vsel %vm76, %v481, 0
    %546 = vmatprep.subr.mxu0 0.0
    %547 = vmatpush1.msra.mxu0 0.0
    %548 = vmatprep.subr.mxu0 0.0
    %549 = vmatpush1.msra.mxu0 0.0
    %550 = vmatprep.subr.mxu0 0.0
    %551 = vmatpush1.msra.mxu0 0.0
    %552 = vmatprep.subr.mxu0 0.0
    %553 = vmatpush1.msra.mxu0 0.0
    %554 = vmatprep.subr.mxu0 0.0
    %555 = vmatpush1.msra.mxu0 0.0
    %556 = vmatprep.subr.mxu0 0.0
    %557 = vmatpush1.msra.mxu0 0.0
    %558 = vmatprep.subr.mxu0 0.0
    %559 = vmatpush1.msra.mxu0 0.0
    %560 = vmatprep.subr.mxu0 0.0
    %561 = vmatpush1.msra.mxu0 0.0
    %562 = vmatprep.subr.mxu0 0.0
    %563 = vmatpush1.msra.mxu0 %v385
    %564 = vmatprep.subr.mxu0 0.0
    %565 = vmatpush1.msra.mxu0 %v384
    %566 = vmatprep.subr.mxu0 0.0
    %567 = vmatpush1.msra.mxu0 %v383
    %568 = vmatprep.subr.mxu0 0.0
    %569 = vmatpush1.msra.mxu0 %v382
    %570 = vmatprep.subr.mxu0 0.0
    %571 = vmatpush1.msra.mxu0 %v381
    %572 = vmatprep.subr.mxu0 0.0
    %573 = vmatpush1.msra.mxu0 %v380
    %574 = vmatprep.subr.mxu0 0.0
    %575 = vmatpush1.msra.mxu0 %v379
    %576 = vmatprep.subr.mxu0 0.0
    %577 = vmatpush1.msra.mxu0 %v378
    %578 = vmatprep.subr.mxu0 0.0
    %579 = vmatpush2.msra.mxu0 0.0
    %580 = vmatprep.subr.mxu0 0.0
    %581 = vmatpush2.msra.mxu0 0.0
    %582 = vmatprep.subr.mxu0 0.0
    %583 = vmatpush2.msra.mxu0 0.0
    %584 = vmatprep.subr.mxu0 0.0
    %585 = vmatpush2.msra.mxu0 0.0
    %586 = vmatprep.subr.mxu0 0.0
    %587 = vmatpush2.msra.mxu0 0.0
    %588 = vmatprep.subr.mxu0 0.0
    %589 = vmatpush2.msra.mxu0 0.0
    %590 = vmatprep.subr.mxu0 0.0
    %591 = vmatpush2.msra.mxu0 0.0
    %592 = vmatprep.subr.mxu0 0.0
    %593 = vmatpush2.msra.mxu0 0.0
    %594 = vmatprep.subr.mxu0 0.0
    %595 = vmatpush2.msra.mxu0 0.0
    %596 = vmatprep.subr.mxu0 0.0
    %597 = vmatpush2.msra.mxu0 0.0
    %598 = vmatprep.subr.mxu0 0.0
    %599 = vmatpush2.msra.mxu0 0.0
    %600 = vmatprep.subr.mxu0 0.0
    %601 = vmatpush2.msra.mxu0 0.0
    %602 = vmatprep.subr.mxu0 0.0
    %603 = vmatpush2.msra.mxu0 0.0
    %604 = vmatprep.subr.mxu0 0.0
    %605 = vmatpush2.msra.mxu0 0.0
    %606 = vmatprep.subr.mxu0 0.0
    %607 = vmatpush2.msra.mxu0 0.0
    %608 = vmatprep.subr.mxu0 0.0
    %609 = vmatpush2.msra.mxu0 0.0
    %610 = vmatprep.mubr.f32.mxu0 0.0
    %611 = vmatmul.mubr.f32.gmra.mxu0 %v482
    %v612 = vpop.f32.mrf.mxu0
    %v613 = vadd.f32 0.0, %v612
    %v614 = vpop.f32.mrf.mxu0
    %615 = vmatprep.mubr.f32.mxu0 0.0
    %616 = vmatmul.mubr.f32.gmra.mxu0 %v484
    %v617 = vpop.f32.mrf.mxu0
    %v618 = vadd.f32 0.0, %v617
    %v619 = vpop.f32.mrf.mxu0
    %620 = vmatprep.mubr.f32.mxu0 0.0
    %621 = vmatmul.mubr.f32.gmra.mxu0 %v486
    %v622 = vpop.f32.mrf.mxu0
    %v623 = vadd.f32 0.0, %v622
    %v624 = vpop.f32.mrf.mxu0
    %625 = vmatprep.mubr.f32.mxu0 0.0
    %626 = vmatmul.mubr.f32.gmra.mxu0 %v488
    %v627 = vpop.f32.mrf.mxu0
    %v628 = vadd.f32 0.0, %v627
    %v629 = vpop.f32.mrf.mxu0
    %630 = vmatprep.mubr.f32.mxu0 0.0
    %631 = vmatmul.mubr.f32.gmra.mxu0 %v490
    %v632 = vpop.f32.mrf.mxu0
    %v633 = vadd.f32 0.0, %v632
    %v634 = vpop.f32.mrf.mxu0
    %635 = vmatprep.mubr.f32.mxu0 0.0
    %636 = vmatmul.mubr.f32.gmra.mxu0 %v492
    %v637 = vpop.f32.mrf.mxu0
    %v638 = vadd.f32 0.0, %v637
    %v639 = vpop.f32.mrf.mxu0
    %640 = vmatprep.mubr.f32.mxu0 0.0
    %641 = vmatmul.mubr.f32.gmra.mxu0 %v494
    %v642 = vpop.f32.mrf.mxu0
    %v643 = vadd.f32 0.0, %v642
    %v644 = vpop.f32.mrf.mxu0
    %645 = vmatprep.mubr.f32.mxu0 0.0
    %646 = vmatmul.mubr.f32.gmra.mxu0 %v496
    %v647 = vpop.f32.mrf.mxu0
    %v648 = vadd.f32 0.0, %v647
    %v649 = vpop.f32.mrf.mxu0
    %650 = vmatprep.mubr.f32.mxu0 0.0
    %651 = vmatmul.mubr.f32.gmra.mxu0 %v498
    %v652 = vpop.f32.mrf.mxu0
    %v653 = vadd.f32 0.0, %v652
    %v654 = vpop.f32.mrf.mxu0
    %655 = vmatprep.mubr.f32.mxu0 0.0
    %656 = vmatmul.mubr.f32.gmra.mxu0 %v500
    %v657 = vpop.f32.mrf.mxu0
    %v658 = vadd.f32 0.0, %v657
    %v659 = vpop.f32.mrf.mxu0
    %660 = vmatprep.mubr.f32.mxu0 0.0
    %661 = vmatmul.mubr.f32.gmra.mxu0 %v502
    %v662 = vpop.f32.mrf.mxu0
    %v663 = vadd.f32 0.0, %v662
    %v664 = vpop.f32.mrf.mxu0
    %665 = vmatprep.mubr.f32.mxu0 0.0
    %666 = vmatmul.mubr.f32.gmra.mxu0 %v504
    %v667 = vpop.f32.mrf.mxu0
    %v668 = vadd.f32 0.0, %v667
    %v669 = vpop.f32.mrf.mxu0
    %670 = vmatprep.mubr.f32.mxu0 0.0
    %671 = vmatmul.mubr.f32.gmra.mxu0 %v506
    %v672 = vpop.f32.mrf.mxu0
    %v673 = vadd.f32 0.0, %v672
    %v674 = vpop.f32.mrf.mxu0
    %675 = vmatprep.mubr.f32.mxu0 0.0
    %676 = vmatmul.mubr.f32.gmra.mxu0 %v508
    %v677 = vpop.f32.mrf.mxu0
    %v678 = vadd.f32 0.0, %v677
    %v679 = vpop.f32.mrf.mxu0
    %680 = vmatprep.mubr.f32.mxu0 0.0
    %681 = vmatmul.mubr.f32.gmra.mxu0 %v510
    %v682 = vpop.f32.mrf.mxu0
    %v683 = vadd.f32 0.0, %v682
    %v684 = vpop.f32.mrf.mxu0
    %685 = vmatprep.mubr.f32.mxu0 0.0
    %686 = vmatmul.mubr.f32.gmra.mxu0 %v512
    %v687 = vpop.f32.mrf.mxu0
    %v688 = vadd.f32 0.0, %v687
    %v689 = vpop.f32.mrf.mxu0
    %690 = vmatprep.mubr.f32.mxu0 0.0
    %691 = vmatmul.mubr.f32.gmra.mxu0 %v514
    %v692 = vpop.f32.mrf.mxu0
    %v693 = vadd.f32 0.0, %v692
    %v694 = vpop.f32.mrf.mxu0
    %695 = vmatprep.mubr.f32.mxu0 0.0
    %696 = vmatmul.mubr.f32.gmra.mxu0 %v516
    %v697 = vpop.f32.mrf.mxu0
    %v698 = vadd.f32 0.0, %v697
    %v699 = vpop.f32.mrf.mxu0
    %700 = vmatprep.mubr.f32.mxu0 0.0
    %701 = vmatmul.mubr.f32.gmra.mxu0 %v518
    %v702 = vpop.f32.mrf.mxu0
    %v703 = vadd.f32 0.0, %v702
    %v704 = vpop.f32.mrf.mxu0
    %705 = vmatprep.mubr.f32.mxu0 0.0
    %706 = vmatmul.mubr.f32.gmra.mxu0 %v520
    %v707 = vpop.f32.mrf.mxu0
    %v708 = vadd.f32 0.0, %v707
    %v709 = vpop.f32.mrf.mxu0
    %710 = vmatprep.mubr.f32.mxu0 0.0
    %711 = vmatmul.mubr.f32.gmra.mxu0 %v522
    %v712 = vpop.f32.mrf.mxu0
    %v713 = vadd.f32 0.0, %v712
    %v714 = vpop.f32.mrf.mxu0
    %715 = vmatprep.mubr.f32.mxu0 0.0
    %716 = vmatmul.mubr.f32.gmra.mxu0 %v524
    %v717 = vpop.f32.mrf.mxu0
    %v718 = vadd.f32 0.0, %v717
    %v719 = vpop.f32.mrf.mxu0
    %720 = vmatprep.mubr.f32.mxu0 0.0
    %721 = vmatmul.mubr.f32.gmra.mxu0 %v526
    %v722 = vpop.f32.mrf.mxu0
    %v723 = vadd.f32 0.0, %v722
    %v724 = vpop.f32.mrf.mxu0
    %725 = vmatprep.mubr.f32.mxu0 0.0
    %726 = vmatmul.mubr.f32.gmra.mxu0 %v528
    %v727 = vpop.f32.mrf.mxu0
    %v728 = vadd.f32 0.0, %v727
    %v729 = vpop.f32.mrf.mxu0
    %730 = vmatprep.mubr.f32.mxu0 0.0
    %731 = vmatmul.mubr.f32.gmra.mxu0 %v530
    %v732 = vpop.f32.mrf.mxu0
    %v733 = vadd.f32 0.0, %v732
    %v734 = vpop.f32.mrf.mxu0
    %735 = vmatprep.mubr.f32.mxu0 0.0
    %736 = vmatmul.mubr.f32.gmra.mxu0 %v532
    %v737 = vpop.f32.mrf.mxu0
    %v738 = vadd.f32 0.0, %v737
    %v739 = vpop.f32.mrf.mxu0
    %740 = vmatprep.mubr.f32.mxu0 0.0
    %741 = vmatmul.mubr.f32.gmra.mxu0 %v534
    %v742 = vpop.f32.mrf.mxu0
    %v743 = vadd.f32 0.0, %v742
    %v744 = vpop.f32.mrf.mxu0
    %745 = vmatprep.mubr.f32.mxu0 0.0
    %746 = vmatmul.mubr.f32.gmra.mxu0 %v536
    %v747 = vpop.f32.mrf.mxu0
    %v748 = vadd.f32 0.0, %v747
    %v749 = vpop.f32.mrf.mxu0
    %750 = vmatprep.mubr.f32.mxu0 0.0
    %751 = vmatmul.mubr.f32.gmra.mxu0 %v538
    %v752 = vpop.f32.mrf.mxu0
    %v753 = vadd.f32 0.0, %v752
    %v754 = vpop.f32.mrf.mxu0
    %755 = vmatprep.mubr.f32.mxu0 0.0
    %756 = vmatmul.mubr.f32.gmra.mxu0 %v540
    %v757 = vpop.f32.mrf.mxu0
    %v758 = vadd.f32 0.0, %v757
    %v759 = vpop.f32.mrf.mxu0
    %760 = vmatprep.mubr.f32.mxu0 0.0
    %761 = vmatmul.mubr.f32.gmra.mxu0 %v542
    %v762 = vpop.f32.mrf.mxu0
    %v763 = vadd.f32 0.0, %v762
    %v764 = vpop.f32.mrf.mxu0
    %765 = vmatprep.mubr.f32.mxu0 0.0
    %766 = vmatmul.mubr.f32.gmra.mxu0 %v544
    %v767 = vpop.f32.mrf.mxu0
    %v768 = vadd.f32 0.0, %v767
    %v769 = vpop.f32.mrf.mxu0
    %770 = vdwg.mxu0
    %vm771 = vcmask 130048
    %v772 = vsel %vm771, %v613, -inf
    %v773 = vsel %vm771, %v623, -inf
    %v774 = vsel %vm771, %v633, -inf
    %v775 = vmax.f32 %v772, %v774
    %v776 = vsel %vm771, %v643, -inf
    %v777 = vmax.f32 %v773, %v776
    %v778 = vsel %vm771, %v653, -inf
    %v779 = vmax.f32 %v775, %v778
    %v780 = vsel %vm771, %v663, -inf
    %v781 = vmax.f32 %v777, %v780
    %v782 = vsel %vm771, %v673, -inf
    %v783 = vmax.f32 %v779, %v782
    %v784 = vsel %vm771, %v683, -inf
    %v785 = vmax.f32 %v781, %v784
    %v786 = vsel %vm771, %v693, -inf
    %v787 = vmax.f32 %v783, %v786
    %v788 = vsel %vm771, %v703, -inf
    %v789 = vmax.f32 %v785, %v788
    %v790 = vsel %vm771, %v713, -inf
    %v791 = vmax.f32 %v787, %v790
    %v792 = vsel %vm771, %v723, -inf
    %v793 = vmax.f32 %v789, %v792
    %v794 = vsel %vm771, %v733, -inf
    %v795 = vmax.f32 %v791, %v794
    %v796 = vsel %vm771, %v743, -inf
    %v797 = vmax.f32 %v793, %v796
    %v798 = vsel %vm771, %v753, -inf
    %v799 = vmax.f32 %v795, %v798
    %v800 = vsel %vm771, %v763, -inf
    %v801 = vmax.f32 %v797, %v800
    %v802 = vmax.f32 %v799, %v801
    %v803 = vsel %vm771, %v618, -inf
    %v804 = vsel %vm771, %v628, -inf
    %v805 = vsel %vm771, %v638, -inf
    %v806 = vmax.f32 %v803, %v805
    %v807 = vsel %vm771, %v648, -inf
    %v808 = vmax.f32 %v804, %v807
    %v809 = vsel %vm771, %v658, -inf
    %v810 = vmax.f32 %v806, %v809
    %v811 = vsel %vm771, %v668, -inf
    %v812 = vmax.f32 %v808, %v811
    %v813 = vsel %vm771, %v678, -inf
    %v814 = vmax.f32 %v810, %v813
    %v815 = vsel %vm771, %v688, -inf
    %v816 = vmax.f32 %v812, %v815
    %v817 = vsel %vm771, %v698, -inf
    %v818 = vmax.f32 %v814, %v817
    %v819 = vsel %vm771, %v708, -inf
    %v820 = vmax.f32 %v816, %v819
    %v821 = vsel %vm771, %v718, -inf
    %v822 = vmax.f32 %v818, %v821
    %v823 = vsel %vm771, %v728, -inf
    %v824 = vmax.f32 %v820, %v823
    %v825 = vsel %vm771, %v738, -inf
    %v826 = vmax.f32 %v822, %v825
    %v827 = vsel %vm771, %v748, -inf
    %v828 = vmax.f32 %v824, %v827
    %v829 = vsel %vm771, %v758, -inf
    %v830 = vmax.f32 %v826, %v829
    %v831 = vsel %vm771, %v768, -inf
    %v832 = vmax.f32 %v828, %v831
    %v833 = vmax.f32 %v830, %v832
    %v834 = vsub.f32 %v613, %v802
    %v835 = vsub.f32 %v618, %v833
    %v836 = vsub.f32 %v623, %v802
    %v837 = vsub.f32 %v628, %v833
    %v838 = vsub.f32 %v633, %v802
    %v839 = vsub.f32 %v638, %v833
    %v840 = vsub.f32 %v643, %v802
    %v841 = vsub.f32 %v648, %v833
    %v842 = vsub.f32 %v653, %v802
    %v843 = vsub.f32 %v658, %v833
    %v844 = vsub.f32 %v663, %v802
    %v845 = vsub.f32 %v668, %v833
    %v846 = vsub.f32 %v673, %v802
    %v847 = vsub.f32 %v678, %v833
    %v848 = vsub.f32 %v683, %v802
    %v849 = vsub.f32 %v688, %v833
    %v850 = vsub.f32 %v693, %v802
    %v851 = vsub.f32 %v698, %v833
    %v852 = vsub.f32 %v703, %v802
    %v853 = vsub.f32 %v708, %v833
    %v854 = vsub.f32 %v713, %v802
    %v855 = vsub.f32 %v718, %v833
    %v856 = vsub.f32 %v723, %v802
    %v857 = vsub.f32 %v728, %v833
    %v858 = vsub.f32 %v733, %v802
    %v859 = vsub.f32 %v738, %v833
    %v860 = vsub.f32 %v743, %v802
    %v861 = vsub.f32 %v748, %v833
    %v862 = vsub.f32 %v753, %v802
    %v863 = vsub.f32 %v758, %v833
    %v864 = vsub.f32 %v763, %v802
    %v865 = vsub.f32 %v768, %v833
    %v866 = vmul.f32 %v834, 1.442695
    %v867 = vpow.pop %v866
    %v868 = vmul.f32 %v835, 1.442695
    %v869 = vpow.pop %v868
    %v870 = vmul.f32 %v836, 1.442695
    %v871 = vpow.pop %v870
    %v872 = vmul.f32 %v837, 1.442695
    %v873 = vpow.pop %v872
    %v874 = vmul.f32 %v838, 1.442695
    %v875 = vpow.pop %v874
    %v876 = vmul.f32 %v839, 1.442695
    %v877 = vpow.pop %v876
    %v878 = vmul.f32 %v840, 1.442695
    %v879 = vpow.pop %v878
    %v880 = vmul.f32 %v841, 1.442695
    %v881 = vpow.pop %v880
    %v882 = vmul.f32 %v842, 1.442695
    %v883 = vpow.pop %v882
    %v884 = vmul.f32 %v843, 1.442695
    %v885 = vpow.pop %v884
    %v886 = vmul.f32 %v844, 1.442695
    %v887 = vpow.pop %v886
    %v888 = vmul.f32 %v845, 1.442695
    %v889 = vpow.pop %v888
    %v890 = vmul.f32 %v846, 1.442695
    %v891 = vpow.pop %v890
    %v892 = vmul.f32 %v847, 1.442695
    %v893 = vpow.pop %v892
    %v894 = vmul.f32 %v848, 1.442695
    %v895 = vpow.pop %v894
    %v896 = vmul.f32 %v849, 1.442695
    %v897 = vpow.pop %v896
    %v898 = vmul.f32 %v850, 1.442695
    %v899 = vpow.pop %v898
    %v900 = vmul.f32 %v851, 1.442695
    %v901 = vpow.pop %v900
    %v902 = vmul.f32 %v852, 1.442695
    %v903 = vpow.pop %v902
    %v904 = vmul.f32 %v853, 1.442695
    %v905 = vpow.pop %v904
    %v906 = vmul.f32 %v854, 1.442695
    %v907 = vpow.pop %v906
    %v908 = vmul.f32 %v855, 1.442695
    %v909 = vpow.pop %v908
    %v910 = vmul.f32 %v856, 1.442695
    %v911 = vpow.pop %v910
    %v912 = vmul.f32 %v857, 1.442695
    %v913 = vpow.pop %v912
    %v914 = vmul.f32 %v858, 1.442695
    %v915 = vpow.pop %v914
    %v916 = vmul.f32 %v859, 1.442695
    %v917 = vpow.pop %v916
    %v918 = vmul.f32 %v860, 1.442695
    %v919 = vpow.pop %v918
    %v920 = vmul.f32 %v861, 1.442695
    %v921 = vpow.pop %v920
    %v922 = vmul.f32 %v862, 1.442695
    %v923 = vpow.pop %v922
    %v924 = vmul.f32 %v863, 1.442695
    %v925 = vpow.pop %v924
    %v926 = vmul.f32 %v864, 1.442695
    %v927 = vpow.pop %v926
    %v928 = vmul.f32 %v865, 1.442695
    %v929 = vpow.pop %v928
    %v930 = vld [vmem:[%s3] sm:$0xff]
    %v931 = vld [vmem:[%s3 + $0x8] sm:$0xff]
    %v932 = vld [vmem:[%s3 + $0x10] sm:$0xff]
    %v933 = vld [vmem:[%s3 + $0x18] sm:$0xff]
    %v934 = vld [vmem:[%s3 + $0x20] sm:$0xff]
    %v935 = vld [vmem:[%s3 + $0x28] sm:$0xff]
    %v936 = vld [vmem:[%s3 + $0x30] sm:$0xff]
    %v937 = vld [vmem:[%s3 + $0x38] sm:$0xff]
    %v938 = vld [vmem:[%s3 + $0x40] sm:$0xff]
    %v939 = vld [vmem:[%s3 + $0x48] sm:$0xff]
    %v940 = vld [vmem:[%s3 + $0x50] sm:$0xff]
    %v941 = vld [vmem:[%s3 + $0x58] sm:$0xff]
    %v942 = vld [vmem:[%s3 + $0x60] sm:$0xff]
    %v943 = vld [vmem:[%s3 + $0x68] sm:$0xff]
    %v944 = vld [vmem:[%s3 + $0x70] sm:$0xff]
    %v945 = vld [vmem:[%s3 + $0x78] sm:$0xff]
    %v946 = vld [vmem:[%s3 + $0x80] sm:$0xff]
    %v947 = vld [vmem:[%s3 + $0x88] sm:$0xff]
    %v948 = vld [vmem:[%s3 + $0x90] sm:$0xff]
    %v949 = vld [vmem:[%s3 + $0x98] sm:$0xff]
    %v950 = vld [vmem:[%s3 + $0xa0] sm:$0xff]
    %v951 = vld [vmem:[%s3 + $0xa8] sm:$0xff]
    %v952 = vld [vmem:[%s3 + $0xb0] sm:$0xff]
    %v953 = vld [vmem:[%s3 + $0xb8] sm:$0xff]
    %v954 = vld [vmem:[%s3 + $0xc0] sm:$0xff]
    %v955 = vld [vmem:[%s3 + $0xc8] sm:$0xff]
    %v956 = vld [vmem:[%s3 + $0xd0] sm:$0xff]
    %v957 = vld [vmem:[%s3 + $0xd8] sm:$0xff]
    %v958 = vld [vmem:[%s3 + $0xe0] sm:$0xff]
    %v959 = vld [vmem:[%s3 + $0xe8] sm:$0xff]
    %v960 = vld [vmem:[%s3 + $0xf0] sm:$0xff]
    %v961 = vld [vmem:[%s3 + $0xf8] sm:$0xff]
    %963 = vset.pattern.permute.xlu0 0
    %964 = vperm.xlu0 %963, %v930
    %v965 = vpop.permute.xlu0 %964
    %968 = vset.pattern.permute.xlu0 0
    %969 = vperm.xlu0 %968, %v931
    %v970 = vpop.permute.xlu0 %969
    %973 = vset.pattern.permute.xlu0 0
    %974 = vperm.xlu0 %973, %v932
    %v975 = vpop.permute.xlu0 %974
    %978 = vset.pattern.permute.xlu0 0
    %979 = vperm.xlu0 %978, %v933
    %v980 = vpop.permute.xlu0 %979
    %983 = vset.pattern.permute.xlu0 0
    %984 = vperm.xlu0 %983, %v934
    %v985 = vpop.permute.xlu0 %984
    %988 = vset.pattern.permute.xlu0 0
    %989 = vperm.xlu0 %988, %v935
    %v990 = vpop.permute.xlu0 %989
    %993 = vset.pattern.permute.xlu0 0
    %994 = vperm.xlu0 %993, %v936
    %v995 = vpop.permute.xlu0 %994
    %998 = vset.pattern.permute.xlu0 0
    %999 = vperm.xlu0 %998, %v937
    %v1000 = vpop.permute.xlu0 %999
    %1003 = vset.pattern.permute.xlu0 0
    %1004 = vperm.xlu0 %1003, %v938
    %v1005 = vpop.permute.xlu0 %1004
    %1008 = vset.pattern.permute.xlu0 0
    %1009 = vperm.xlu0 %1008, %v939
    %v1010 = vpop.permute.xlu0 %1009
    %1013 = vset.pattern.permute.xlu0 0
    %1014 = vperm.xlu0 %1013, %v940
    %v1015 = vpop.permute.xlu0 %1014
    %1018 = vset.pattern.permute.xlu0 0
    %1019 = vperm.xlu0 %1018, %v941
    %v1020 = vpop.permute.xlu0 %1019
    %1023 = vset.pattern.permute.xlu0 0
    %1024 = vperm.xlu0 %1023, %v942
    %v1025 = vpop.permute.xlu0 %1024
    %1028 = vset.pattern.permute.xlu0 0
    %1029 = vperm.xlu0 %1028, %v943
    %v1030 = vpop.permute.xlu0 %1029
    %1033 = vset.pattern.permute.xlu0 0
    %1034 = vperm.xlu0 %1033, %v944
    %v1035 = vpop.permute.xlu0 %1034
    %1038 = vset.pattern.permute.xlu0 0
    %1039 = vperm.xlu0 %1038, %v945
    %v1040 = vpop.permute.xlu0 %1039
    %1043 = vset.pattern.permute.xlu0 0
    %1044 = vperm.xlu0 %1043, %v946
    %v1045 = vpop.permute.xlu0 %1044
    %1048 = vset.pattern.permute.xlu0 0
    %1049 = vperm.xlu0 %1048, %v947
    %v1050 = vpop.permute.xlu0 %1049
    %1053 = vset.pattern.permute.xlu0 0
    %1054 = vperm.xlu0 %1053, %v948
    %v1055 = vpop.permute.xlu0 %1054
    %1058 = vset.pattern.permute.xlu0 0
    %1059 = vperm.xlu0 %1058, %v949
    %v1060 = vpop.permute.xlu0 %1059
    %1063 = vset.pattern.permute.xlu0 0
    %1064 = vperm.xlu0 %1063, %v950
    %v1065 = vpop.permute.xlu0 %1064
    %1068 = vset.pattern.permute.xlu0 0
    %1069 = vperm.xlu0 %1068, %v951
    %v1070 = vpop.permute.xlu0 %1069
    %1073 = vset.pattern.permute.xlu0 0
    %1074 = vperm.xlu0 %1073, %v952
    %v1075 = vpop.permute.xlu0 %1074
    %1078 = vset.pattern.permute.xlu0 0
    %1079 = vperm.xlu0 %1078, %v953
    %v1080 = vpop.permute.xlu0 %1079
    %1083 = vset.pattern.permute.xlu0 0
    %1084 = vperm.xlu0 %1083, %v954
    %v1085 = vpop.permute.xlu0 %1084
    %1088 = vset.pattern.permute.xlu0 0
    %1089 = vperm.xlu0 %1088, %v955
    %v1090 = vpop.permute.xlu0 %1089
    %1093 = vset.pattern.permute.xlu0 0
    %1094 = vperm.xlu0 %1093, %v956
    %v1095 = vpop.permute.xlu0 %1094
    %1098 = vset.pattern.permute.xlu0 0
    %1099 = vperm.xlu0 %1098, %v957
    %v1100 = vpop.permute.xlu0 %1099
    %1103 = vset.pattern.permute.xlu0 0
    %1104 = vperm.xlu0 %1103, %v958
    %v1105 = vpop.permute.xlu0 %1104
    %1108 = vset.pattern.permute.xlu0 0
    %1109 = vperm.xlu0 %1108, %v959
    %v1110 = vpop.permute.xlu0 %1109
    %1113 = vset.pattern.permute.xlu0 0
    %1114 = vperm.xlu0 %1113, %v960
    %v1115 = vpop.permute.xlu0 %1114
    %1118 = vset.pattern.permute.xlu0 0
    %1119 = vperm.xlu0 %1118, %v961
    %v1120 = vpop.permute.xlu0 %1119
    %v1122 = vmul.f32 %v867, %v965
    %v1123 = vmul.f32 %v869, %v970
    %v1124 = vmul.f32 %v871, %v975
    %v1125 = vmul.f32 %v873, %v980
    %v1126 = vmul.f32 %v875, %v985
    %v1127 = vmul.f32 %v877, %v990
    %v1128 = vmul.f32 %v879, %v995
    %v1129 = vmul.f32 %v881, %v1000
    %v1130 = vmul.f32 %v883, %v1005
    %v1131 = vmul.f32 %v885, %v1010
    %v1132 = vmul.f32 %v887, %v1015
    %v1133 = vmul.f32 %v889, %v1020
    %v1134 = vmul.f32 %v891, %v1025
    %v1135 = vmul.f32 %v893, %v1030
    %v1136 = vmul.f32 %v895, %v1035
    %v1137 = vmul.f32 %v897, %v1040
    %v1138 = vmul.f32 %v899, %v1045
    %v1139 = vmul.f32 %v901, %v1050
    %v1140 = vmul.f32 %v903, %v1055
    %v1141 = vmul.f32 %v905, %v1060
    %v1142 = vmul.f32 %v907, %v1065
    %v1143 = vmul.f32 %v909, %v1070
    %v1144 = vmul.f32 %v911, %v1075
    %v1145 = vmul.f32 %v913, %v1080
    %v1146 = vmul.f32 %v915, %v1085
    %v1147 = vmul.f32 %v917, %v1090
    %v1148 = vmul.f32 %v919, %v1095
    %v1149 = vmul.f32 %v921, %v1100
    %v1150 = vmul.f32 %v923, %v1105
    %v1151 = vmul.f32 %v925, %v1110
    %v1152 = vmul.f32 %v927, %v1115
    %v1153 = vmul.f32 %v929, %v1120
    %v1154 = vsel %vm771, %v1122, 0.0
    %v1155 = vsel %vm771, %v1124, 0.0
    %v1156 = vadd.f32 %v1154, %v1155
    %v1157 = vsel %vm771, %v1126, 0.0
    %v1158 = vadd.f32 %v1156, %v1157
    %v1159 = vsel %vm771, %v1128, 0.0
    %v1160 = vadd.f32 %v1158, %v1159
    %v1161 = vsel %vm771, %v1130, 0.0
    %v1162 = vadd.f32 %v1160, %v1161
    %v1163 = vsel %vm771, %v1132, 0.0
    %v1164 = vadd.f32 %v1162, %v1163
    %v1165 = vsel %vm771, %v1134, 0.0
    %v1166 = vadd.f32 %v1164, %v1165
    %v1167 = vsel %vm771, %v1136, 0.0
    %v1168 = vadd.f32 %v1166, %v1167
    %v1169 = vsel %vm771, %v1138, 0.0
    %v1170 = vadd.f32 %v1168, %v1169
    %v1171 = vsel %vm771, %v1140, 0.0
    %v1172 = vadd.f32 %v1170, %v1171
    %v1173 = vsel %vm771, %v1142, 0.0
    %v1174 = vadd.f32 %v1172, %v1173
    %v1175 = vsel %vm771, %v1144, 0.0
    %v1176 = vadd.f32 %v1174, %v1175
    %v1177 = vsel %vm771, %v1146, 0.0
    %v1178 = vadd.f32 %v1176, %v1177
    %v1179 = vsel %vm771, %v1148, 0.0
    %v1180 = vadd.f32 %v1178, %v1179
    %v1181 = vsel %vm771, %v1150, 0.0
    %v1182 = vadd.f32 %v1180, %v1181
    %v1183 = vsel %vm771, %v1152, 0.0
    %v1184 = vadd.f32 %v1182, %v1183
    %v1185 = vsel %vm771, %v1123, 0.0
    %v1186 = vsel %vm771, %v1125, 0.0
    %v1187 = vadd.f32 %v1185, %v1186
    %v1188 = vsel %vm771, %v1127, 0.0
    %v1189 = vadd.f32 %v1187, %v1188
    %v1190 = vsel %vm771, %v1129, 0.0
    %v1191 = vadd.f32 %v1189, %v1190
    %v1192 = vsel %vm771, %v1131, 0.0
    %v1193 = vadd.f32 %v1191, %v1192
    %v1194 = vsel %vm771, %v1133, 0.0
    %v1195 = vadd.f32 %v1193, %v1194
    %v1196 = vsel %vm771, %v1135, 0.0
    %v1197 = vadd.f32 %v1195, %v1196
    %v1198 = vsel %vm771, %v1137, 0.0
    %v1199 = vadd.f32 %v1197, %v1198
    %v1200 = vsel %vm771, %v1139, 0.0
    %v1201 = vadd.f32 %v1199, %v1200
    %v1202 = vsel %vm771, %v1141, 0.0
    %v1203 = vadd.f32 %v1201, %v1202
    %v1204 = vsel %vm771, %v1143, 0.0
    %v1205 = vadd.f32 %v1203, %v1204
    %v1206 = vsel %vm771, %v1145, 0.0
    %v1207 = vadd.f32 %v1205, %v1206
    %v1208 = vsel %vm771, %v1147, 0.0
    %v1209 = vadd.f32 %v1207, %v1208
    %v1210 = vsel %vm771, %v1149, 0.0
    %v1211 = vadd.f32 %v1209, %v1210
    %v1212 = vsel %vm771, %v1151, 0.0
    %v1213 = vadd.f32 %v1211, %v1212
    %v1214 = vsel %vm771, %v1153, 0.0
    %v1215 = vadd.f32 %v1213, %v1214
    %v1216 = vrcp.pop %v1184
    %v1217 = vmul.f32 %v1122, %v1216
    %v1218 = vrcp.pop %v1215
    %v1219 = vmul.f32 %v1123, %v1218
    %v1220 = vmul.f32 %v1124, %v1216
    %v1221 = vmul.f32 %v1125, %v1218
    %v1222 = vmul.f32 %v1126, %v1216
    %v1223 = vmul.f32 %v1127, %v1218
    %v1224 = vmul.f32 %v1128, %v1216
    %v1225 = vmul.f32 %v1129, %v1218
    %v1226 = vmul.f32 %v1130, %v1216
    %v1227 = vmul.f32 %v1131, %v1218
    %v1228 = vmul.f32 %v1132, %v1216
    %v1229 = vmul.f32 %v1133, %v1218
    %v1230 = vmul.f32 %v1134, %v1216
    %v1231 = vmul.f32 %v1135, %v1218
    %v1232 = vmul.f32 %v1136, %v1216
    %v1233 = vmul.f32 %v1137, %v1218
    %v1234 = vmul.f32 %v1138, %v1216
    %v1235 = vmul.f32 %v1139, %v1218
    %v1236 = vmul.f32 %v1140, %v1216
    %v1237 = vmul.f32 %v1141, %v1218
    %v1238 = vmul.f32 %v1142, %v1216
    %v1239 = vmul.f32 %v1143, %v1218
    %v1240 = vmul.f32 %v1144, %v1216
    %v1241 = vmul.f32 %v1145, %v1218
    %v1242 = vmul.f32 %v1146, %v1216
    %v1243 = vmul.f32 %v1147, %v1218
    %v1244 = vmul.f32 %v1148, %v1216
    %v1245 = vmul.f32 %v1149, %v1218
    %v1246 = vmul.f32 %v1150, %v1216
    %v1247 = vmul.f32 %v1151, %v1218
    %v1248 = vmul.f32 %v1152, %v1216
    %v1249 = vmul.f32 %v1153, %v1218
    %v1250 = vld [vmem:[#allocation2 + $0x20] sm:$0xff]
    %v1251 = vld [vmem:[#allocation2 + $0x58] sm:$0xff]
    %1254 = vrot.lane.b32.xlu0 %v1250, 112
    %v1255 = vpop.permute.xlu0 %1254
    %1256 = vrot.lane.b32.xlu0 %v1251, 112
    %v1257 = vpop.permute.xlu0 %1256
    %v1261 = vsel %vm771, %v1217, 0
    %v1264 = vsel %vm771, %v1219, 0
    %v1267 = vsel %vm771, %v1220, 0
    %v1270 = vsel %vm771, %v1221, 0
    %v1273 = vsel %vm771, %v1222, 0
    %v1276 = vsel %vm771, %v1223, 0
    %v1279 = vsel %vm771, %v1224, 0
    %v1282 = vsel %vm771, %v1225, 0
    %v1285 = vsel %vm771, %v1226, 0
    %v1288 = vsel %vm771, %v1227, 0
    %v1291 = vsel %vm771, %v1228, 0
    %v1294 = vsel %vm771, %v1229, 0
    %v1297 = vsel %vm771, %v1230, 0
    %v1300 = vsel %vm771, %v1231, 0
    %v1303 = vsel %vm771, %v1232, 0
    %v1306 = vsel %vm771, %v1233, 0
    %v1309 = vsel %vm771, %v1234, 0
    %v1312 = vsel %vm771, %v1235, 0
    %v1315 = vsel %vm771, %v1236, 0
    %v1318 = vsel %vm771, %v1237, 0
    %v1321 = vsel %vm771, %v1238, 0
    %v1324 = vsel %vm771, %v1239, 0
    %v1327 = vsel %vm771, %v1240, 0
    %v1330 = vsel %vm771, %v1241, 0
    %v1333 = vsel %vm771, %v1242, 0
    %v1336 = vsel %vm771, %v1243, 0
    %v1339 = vsel %vm771, %v1244, 0
    %v1342 = vsel %vm771, %v1245, 0
    %v1345 = vsel %vm771, %v1246, 0
    %v1348 = vsel %vm771, %v1247, 0
    %v1351 = vsel %vm771, %v1248, 0
    %v1354 = vsel %vm771, %v1249, 0
    %1356 = vmatprep.subr.mxu0 0.0
    %1357 = vmatpush1.msra.mxu0 0.0
    %1358 = vmatprep.subr.mxu0 0.0
    %1359 = vmatpush1.msra.mxu0 0.0
    %1360 = vmatprep.subr.mxu0 0.0
    %1361 = vmatpush1.msra.mxu0 0.0
    %1362 = vmatprep.subr.mxu0 0.0
    %1363 = vmatpush1.msra.mxu0 0.0
    %1364 = vmatprep.subr.mxu0 0.0
    %1365 = vmatpush1.msra.mxu0 0.0
    %1366 = vmatprep.subr.mxu0 0.0
    %1367 = vmatpush1.msra.mxu0 0.0
    %1368 = vmatprep.subr.mxu0 0.0
    %1369 = vmatpush1.msra.mxu0 0.0
    %1370 = vmatprep.subr.mxu0 0.0
    %1371 = vmatpush1.msra.mxu0 0.0
    %1372 = vmatprep.subr.mxu0 0.0
    %1373 = vmatpush1.msra.mxu0 0.0
    %1374 = vmatprep.subr.mxu0 0.0
    %1375 = vmatpush1.msra.mxu0 0.0
    %1376 = vmatprep.subr.mxu0 0.0
    %1377 = vmatpush1.msra.mxu0 0.0
    %1378 = vmatprep.subr.mxu0 0.0
    %1379 = vmatpush1.msra.mxu0 0.0
    %1380 = vmatprep.subr.mxu0 0.0
    %1381 = vmatpush1.msra.mxu0 0.0
    %1382 = vmatprep.subr.mxu0 0.0
    %1383 = vmatpush1.msra.mxu0 0.0
    %1384 = vmatprep.subr.mxu0 0.0
    %1385 = vmatpush1.msra.mxu0 %v1257
    %1386 = vmatprep.subr.mxu0 0.0
    %1387 = vmatpush1.msra.mxu0 %v1255
    %1388 = vmatprep.subr.mxu0 0.0
    %1389 = vmatpush2.msra.mxu0 0.0
    %1390 = vmatprep.subr.mxu0 0.0
    %1391 = vmatpush2.msra.mxu0 0.0
    %1392 = vmatprep.subr.mxu0 0.0
    %1393 = vmatpush2.msra.mxu0 0.0
    %1394 = vmatprep.subr.mxu0 0.0
    %1395 = vmatpush2.msra.mxu0 0.0
    %1396 = vmatprep.subr.mxu0 0.0
    %1397 = vmatpush2.msra.mxu0 0.0
    %1398 = vmatprep.subr.mxu0 0.0
    %1399 = vmatpush2.msra.mxu0 0.0
    %1400 = vmatprep.subr.mxu0 0.0
    %1401 = vmatpush2.msra.mxu0 0.0
    %1402 = vmatprep.subr.mxu0 0.0
    %1403 = vmatpush2.msra.mxu0 0.0
    %1404 = vmatprep.subr.mxu0 0.0
    %1405 = vmatpush2.msra.mxu0 0.0
    %1406 = vmatprep.subr.mxu0 0.0
    %1407 = vmatpush2.msra.mxu0 0.0
    %1408 = vmatprep.subr.mxu0 0.0
    %1409 = vmatpush2.msra.mxu0 0.0
    %1410 = vmatprep.subr.mxu0 0.0
    %1411 = vmatpush2.msra.mxu0 0.0
    %1412 = vmatprep.subr.mxu0 0.0
    %1413 = vmatpush2.msra.mxu0 0.0
    %1414 = vmatprep.subr.mxu0 0.0
    %1415 = vmatpush2.msra.mxu0 0.0
    %1416 = vmatprep.subr.mxu0 0.0
    %1417 = vmatpush2.msra.mxu0 0.0
    %1418 = vmatprep.subr.mxu0 0.0
    %1419 = vmatpush2.msra.mxu0 0.0
    %1420 = vmatprep.mubr.f32.mxu0 0.0
    %1421 = vmatmul.mubr.f32.gmra.mxu0 %v1261
    %v1422 = vpop.f32.mrf.mxu0
    %v1423 = vadd.f32 0.0, %v1422
    %v1424 = vpop.f32.mrf.mxu0
    %1425 = vmatprep.mubr.f32.mxu0 0.0
    %1426 = vmatmul.mubr.f32.gmra.mxu0 %v1264
    %v1427 = vpop.f32.mrf.mxu0
    %v1428 = vadd.f32 0.0, %v1427
    %v1429 = vpop.f32.mrf.mxu0
    %1430 = vmatprep.mubr.f32.mxu0 0.0
    %1431 = vmatmul.mubr.f32.gmra.mxu0 %v1267
    %v1432 = vpop.f32.mrf.mxu0
    %v1433 = vadd.f32 0.0, %v1432
    %v1434 = vpop.f32.mrf.mxu0
    %1435 = vmatprep.mubr.f32.mxu0 0.0
    %1436 = vmatmul.mubr.f32.gmra.mxu0 %v1270
    %v1437 = vpop.f32.mrf.mxu0
    %v1438 = vadd.f32 0.0, %v1437
    %v1439 = vpop.f32.mrf.mxu0
    %1440 = vmatprep.mubr.f32.mxu0 0.0
    %1441 = vmatmul.mubr.f32.gmra.mxu0 %v1273
    %v1442 = vpop.f32.mrf.mxu0
    %v1443 = vadd.f32 0.0, %v1442
    %v1444 = vpop.f32.mrf.mxu0
    %1445 = vmatprep.mubr.f32.mxu0 0.0
    %1446 = vmatmul.mubr.f32.gmra.mxu0 %v1276
    %v1447 = vpop.f32.mrf.mxu0
    %v1448 = vadd.f32 0.0, %v1447
    %v1449 = vpop.f32.mrf.mxu0
    %1450 = vmatprep.mubr.f32.mxu0 0.0
    %1451 = vmatmul.mubr.f32.gmra.mxu0 %v1279
    %v1452 = vpop.f32.mrf.mxu0
    %v1453 = vadd.f32 0.0, %v1452
    %v1454 = vpop.f32.mrf.mxu0
    %1455 = vmatprep.mubr.f32.mxu0 0.0
    %1456 = vmatmul.mubr.f32.gmra.mxu0 %v1282
    %v1457 = vpop.f32.mrf.mxu0
    %v1458 = vadd.f32 0.0, %v1457
    %v1459 = vpop.f32.mrf.mxu0
    %1460 = vmatprep.mubr.f32.mxu0 0.0
    %1461 = vmatmul.mubr.f32.gmra.mxu0 %v1285
    %v1462 = vpop.f32.mrf.mxu0
    %v1463 = vadd.f32 0.0, %v1462
    %v1464 = vpop.f32.mrf.mxu0
    %1465 = vmatprep.mubr.f32.mxu0 0.0
    %1466 = vmatmul.mubr.f32.gmra.mxu0 %v1288
    %v1467 = vpop.f32.mrf.mxu0
    %v1468 = vadd.f32 0.0, %v1467
    %v1469 = vpop.f32.mrf.mxu0
    %1470 = vmatprep.mubr.f32.mxu0 0.0
    %1471 = vmatmul.mubr.f32.gmra.mxu0 %v1291
    %v1472 = vpop.f32.mrf.mxu0
    %v1473 = vadd.f32 0.0, %v1472
    %v1474 = vpop.f32.mrf.mxu0
    %1475 = vmatprep.mubr.f32.mxu0 0.0
    %1476 = vmatmul.mubr.f32.gmra.mxu0 %v1294
    %v1477 = vpop.f32.mrf.mxu0
    %v1478 = vadd.f32 0.0, %v1477
    %v1479 = vpop.f32.mrf.mxu0
    %1480 = vmatprep.mubr.f32.mxu0 0.0
    %1481 = vmatmul.mubr.f32.gmra.mxu0 %v1297
    %v1482 = vpop.f32.mrf.mxu0
    %v1483 = vadd.f32 0.0, %v1482
    %v1484 = vpop.f32.mrf.mxu0
    %1485 = vmatprep.mubr.f32.mxu0 0.0
    %1486 = vmatmul.mubr.f32.gmra.mxu0 %v1300
    %v1487 = vpop.f32.mrf.mxu0
    %v1488 = vadd.f32 0.0, %v1487
    %v1489 = vpop.f32.mrf.mxu0
    %1490 = vmatprep.mubr.f32.mxu0 0.0
    %1491 = vmatmul.mubr.f32.gmra.mxu0 %v1303
    %v1492 = vpop.f32.mrf.mxu0
    %v1493 = vadd.f32 0.0, %v1492
    %v1494 = vpop.f32.mrf.mxu0
    %1495 = vmatprep.mubr.f32.mxu0 0.0
    %1496 = vmatmul.mubr.f32.gmra.mxu0 %v1306
    %v1497 = vpop.f32.mrf.mxu0
    %v1498 = vadd.f32 0.0, %v1497
    %v1499 = vpop.f32.mrf.mxu0
    %1500 = vmatprep.mubr.f32.mxu0 0.0
    %1501 = vmatmul.mubr.f32.gmra.mxu0 %v1309
    %v1502 = vpop.f32.mrf.mxu0
    %v1503 = vadd.f32 0.0, %v1502
    %v1504 = vpop.f32.mrf.mxu0
    %1505 = vmatprep.mubr.f32.mxu0 0.0
    %1506 = vmatmul.mubr.f32.gmra.mxu0 %v1312
    %v1507 = vpop.f32.mrf.mxu0
    %v1508 = vadd.f32 0.0, %v1507
    %v1509 = vpop.f32.mrf.mxu0
    %1510 = vmatprep.mubr.f32.mxu0 0.0
    %1511 = vmatmul.mubr.f32.gmra.mxu0 %v1315
    %v1512 = vpop.f32.mrf.mxu0
    %v1513 = vadd.f32 0.0, %v1512
    %v1514 = vpop.f32.mrf.mxu0
    %1515 = vmatprep.mubr.f32.mxu0 0.0
    %1516 = vmatmul.mubr.f32.gmra.mxu0 %v1318
    %v1517 = vpop.f32.mrf.mxu0
    %v1518 = vadd.f32 0.0, %v1517
    %v1519 = vpop.f32.mrf.mxu0
    %1520 = vmatprep.mubr.f32.mxu0 0.0
    %1521 = vmatmul.mubr.f32.gmra.mxu0 %v1321
    %v1522 = vpop.f32.mrf.mxu0
    %v1523 = vadd.f32 0.0, %v1522
    %v1524 = vpop.f32.mrf.mxu0
    %1525 = vmatprep.mubr.f32.mxu0 0.0
    %1526 = vmatmul.mubr.f32.gmra.mxu0 %v1324
    %v1527 = vpop.f32.mrf.mxu0
    %v1528 = vadd.f32 0.0, %v1527
    %v1529 = vpop.f32.mrf.mxu0
    %1530 = vmatprep.mubr.f32.mxu0 0.0
    %1531 = vmatmul.mubr.f32.gmra.mxu0 %v1327
    %v1532 = vpop.f32.mrf.mxu0
    %v1533 = vadd.f32 0.0, %v1532
    %v1534 = vpop.f32.mrf.mxu0
    %1535 = vmatprep.mubr.f32.mxu0 0.0
    %1536 = vmatmul.mubr.f32.gmra.mxu0 %v1330
    %v1537 = vpop.f32.mrf.mxu0
    %v1538 = vadd.f32 0.0, %v1537
    %v1539 = vpop.f32.mrf.mxu0
    %1540 = vmatprep.mubr.f32.mxu0 0.0
    %1541 = vmatmul.mubr.f32.gmra.mxu0 %v1333
    %v1542 = vpop.f32.mrf.mxu0
    %v1543 = vadd.f32 0.0, %v1542
    %v1544 = vpop.f32.mrf.mxu0
    %1545 = vmatprep.mubr.f32.mxu0 0.0
    %1546 = vmatmul.mubr.f32.gmra.mxu0 %v1336
    %v1547 = vpop.f32.mrf.mxu0
    %v1548 = vadd.f32 0.0, %v1547
    %v1549 = vpop.f32.mrf.mxu0
    %1550 = vmatprep.mubr.f32.mxu0 0.0
    %1551 = vmatmul.mubr.f32.gmra.mxu0 %v1339
    %v1552 = vpop.f32.mrf.mxu0
    %v1553 = vadd.f32 0.0, %v1552
    %v1554 = vpop.f32.mrf.mxu0
    %1555 = vmatprep.mubr.f32.mxu0 0.0
    %1556 = vmatmul.mubr.f32.gmra.mxu0 %v1342
    %v1557 = vpop.f32.mrf.mxu0
    %v1558 = vadd.f32 0.0, %v1557
    %v1559 = vpop.f32.mrf.mxu0
    %1560 = vmatprep.mubr.f32.mxu0 0.0
    %1561 = vmatmul.mubr.f32.gmra.mxu0 %v1345
    %v1562 = vpop.f32.mrf.mxu0
    %v1563 = vadd.f32 0.0, %v1562
    %v1564 = vpop.f32.mrf.mxu0
    %1565 = vmatprep.mubr.f32.mxu0 0.0
    %1566 = vmatmul.mubr.f32.gmra.mxu0 %v1348
    %v1567 = vpop.f32.mrf.mxu0
    %v1568 = vadd.f32 0.0, %v1567
    %v1569 = vpop.f32.mrf.mxu0
    %1570 = vmatprep.mubr.f32.mxu0 0.0
    %1571 = vmatmul.mubr.f32.gmra.mxu0 %v1351
    %v1572 = vpop.f32.mrf.mxu0
    %v1573 = vadd.f32 0.0, %v1572
    %v1574 = vpop.f32.mrf.mxu0
    %1575 = vmatprep.mubr.f32.mxu0 0.0
    %1576 = vmatmul.mubr.f32.gmra.mxu0 %v1354
    %v1577 = vpop.f32.mrf.mxu0
    %v1578 = vadd.f32 0.0, %v1577
    %v1579 = vpop.f32.mrf.mxu0
    %1580 = vdwg.mxu0
    %v1583 = vcombine.high %v152, %v152
    %v1585 = vunpack.c.l.s4 1966171168
    %v1586 = vunpack.c.0.s8 %v1585
    %v1587 = vlaneseq
    %v1588 = vshrl.u32 %v1587, 7
    %v1589 = vsub.s32 %v1586, %v1588
    %v1590 = vrot.slane %v152, %v1589
    %v1592 = vunpack.c.l.s4 1966171168
    %v1593 = vunpack.c.0.s8 %v1592
    %v1594 = vlaneseq
    %v1595 = vshrl.u32 %v1594, 7
    %v1596 = vsub.s32 %v1593, %v1595
    %v1597 = vrot.slane %v1583, %v1596
    %v1598 = vcombine.high %v1590, %v1590
    %v1599 = vcombine.high %v1597, %v1597
    %v1601 = vunpack.c.l.s4 1966171168
    %v1602 = vunpack.c.0.s8 %v1601
    %v1603 = vlaneseq
    %v1604 = vshrl.u32 %v1603, 7
    %v1605 = vsub.s32 %v1602, %v1604
    %v1606 = vrot.slane %v1590, %v1605
    %v1608 = vunpack.c.l.s4 1966171168
    %v1609 = vunpack.c.0.s8 %v1608
    %v1610 = vlaneseq
    %v1611 = vshrl.u32 %v1610, 7
    %v1612 = vsub.s32 %v1609, %v1611
    %v1613 = vrot.slane %v1597, %v1612
    %v1615 = vunpack.c.l.s4 1966171168
    %v1616 = vunpack.c.0.s8 %v1615
    %v1617 = vlaneseq
    %v1618 = vshrl.u32 %v1617, 7
    %v1619 = vsub.s32 %v1616, %v1618
    %v1620 = vrot.slane %v1598, %v1619
    %v1622 = vunpack.c.l.s4 1966171168
    %v1623 = vunpack.c.0.s8 %v1622
    %v1624 = vlaneseq
    %v1625 = vshrl.u32 %v1624, 7
    %v1626 = vsub.s32 %v1623, %v1625
    %v1627 = vrot.slane %v1599, %v1626
    %v1628 = vcombine.high %v1606, %v1606
    %v1629 = vcombine.high %v1613, %v1613
    %v1630 = vcombine.high %v1620, %v1620
    %v1631 = vcombine.high %v1627, %v1627
    %v1632 = vcombine.high %v158, %v158
    %v1634 = vunpack.c.l.s4 1966171168
    %v1635 = vunpack.c.0.s8 %v1634
    %v1636 = vlaneseq
    %v1637 = vshrl.u32 %v1636, 7
    %v1638 = vsub.s32 %v1635, %v1637
    %v1639 = vrot.slane %v158, %v1638
    %v1641 = vunpack.c.l.s4 1966171168
    %v1642 = vunpack.c.0.s8 %v1641
    %v1643 = vlaneseq
    %v1644 = vshrl.u32 %v1643, 7
    %v1645 = vsub.s32 %v1642, %v1644
    %v1646 = vrot.slane %v1632, %v1645
    %v1647 = vcombine.high %v1639, %v1639
    %v1648 = vcombine.high %v1646, %v1646
    %v1650 = vunpack.c.l.s4 1966171168
    %v1651 = vunpack.c.0.s8 %v1650
    %v1652 = vlaneseq
    %v1653 = vshrl.u32 %v1652, 7
    %v1654 = vsub.s32 %v1651, %v1653
    %v1655 = vrot.slane %v1639, %v1654
    %v1657 = vunpack.c.l.s4 1966171168
    %v1658 = vunpack.c.0.s8 %v1657
    %v1659 = vlaneseq
    %v1660 = vshrl.u32 %v1659, 7
    %v1661 = vsub.s32 %v1658, %v1660
    %v1662 = vrot.slane %v1646, %v1661
    %v1664 = vunpack.c.l.s4 1966171168
    %v1665 = vunpack.c.0.s8 %v1664
    %v1666 = vlaneseq
    %v1667 = vshrl.u32 %v1666, 7
    %v1668 = vsub.s32 %v1665, %v1667
    %v1669 = vrot.slane %v1647, %v1668
    %v1671 = vunpack.c.l.s4 1966171168
    %v1672 = vunpack.c.0.s8 %v1671
    %v1673 = vlaneseq
    %v1674 = vshrl.u32 %v1673, 7
    %v1675 = vsub.s32 %v1672, %v1674
    %v1676 = vrot.slane %v1648, %v1675
    %v1677 = vcombine.high %v1655, %v1655
    %v1678 = vcombine.high %v1662, %v1662
    %v1679 = vcombine.high %v1669, %v1669
    %v1680 = vcombine.high %v1676, %v1676
    %v1681 = vlaneseq
    %v1682 = vshrl.u32 %v1681, 7
    %v1683 = vsub.s32 0, %v1682
    %v1684 = vrot.slane %v1606, %v1683
    %v1685 = vlaneseq
    %v1686 = vshrl.u32 %v1685, 7
    %v1687 = vsub.s32 0, %v1686
    %v1688 = vrot.slane %v1620, %v1687
    %v1689 = vlaneseq
    %v1690 = vshrl.u32 %v1689, 7
    %v1691 = vsub.s32 0, %v1690
    %v1692 = vrot.slane %v1628, %v1691
    %v1693 = vlaneseq
    %v1694 = vshrl.u32 %v1693, 7
    %v1695 = vsub.s32 0, %v1694
    %v1696 = vrot.slane %v1630, %v1695
    %v1697 = vlaneseq
    %v1698 = vshrl.u32 %v1697, 7
    %v1699 = vsub.s32 0, %v1698
    %v1700 = vrot.slane %v1613, %v1699
    %v1701 = vlaneseq
    %v1702 = vshrl.u32 %v1701, 7
    %v1703 = vsub.s32 0, %v1702
    %v1704 = vrot.slane %v1627, %v1703
    %v1705 = vlaneseq
    %v1706 = vshrl.u32 %v1705, 7
    %v1707 = vsub.s32 0, %v1706
    %v1708 = vrot.slane %v1629, %v1707
    %v1709 = vlaneseq
    %v1710 = vshrl.u32 %v1709, 7
    %v1711 = vsub.s32 0, %v1710
    %v1712 = vrot.slane %v1631, %v1711
    %v1713 = vlaneseq
    %v1714 = vshrl.u32 %v1713, 7
    %v1715 = vsub.s32 0, %v1714
    %v1716 = vrot.slane %v1655, %v1715
    %v1717 = vlaneseq
    %v1718 = vshrl.u32 %v1717, 7
    %v1719 = vsub.s32 0, %v1718
    %v1720 = vrot.slane %v1669, %v1719
    %v1721 = vlaneseq
    %v1722 = vshrl.u32 %v1721, 7
    %v1723 = vsub.s32 0, %v1722
    %v1724 = vrot.slane %v1677, %v1723
    %v1725 = vlaneseq
    %v1726 = vshrl.u32 %v1725, 7
    %v1727 = vsub.s32 0, %v1726
    %v1728 = vrot.slane %v1679, %v1727
    %v1729 = vlaneseq
    %v1730 = vshrl.u32 %v1729, 7
    %v1731 = vsub.s32 0, %v1730
    %v1732 = vrot.slane %v1662, %v1731
    %v1733 = vlaneseq
    %v1734 = vshrl.u32 %v1733, 7
    %v1735 = vsub.s32 0, %v1734
    %v1736 = vrot.slane %v1676, %v1735
    %v1737 = vlaneseq
    %v1738 = vshrl.u32 %v1737, 7
    %v1739 = vsub.s32 0, %v1738
    %v1740 = vrot.slane %v1678, %v1739
    %v1741 = vlaneseq
    %v1742 = vshrl.u32 %v1741, 7
    %v1743 = vsub.s32 0, %v1742
    %v1744 = vrot.slane %v1680, %v1743
    %v1761 = vmul.f32 %v1423, %v1684
    %v1762 = vmul.f32 %v1428, %v1684
    %v1763 = vmul.f32 %v1433, %v1688
    %v1764 = vmul.f32 %v1438, %v1688
    %v1765 = vmul.f32 %v1443, %v1692
    %v1766 = vmul.f32 %v1448, %v1692
    %v1767 = vmul.f32 %v1453, %v1696
    %v1768 = vmul.f32 %v1458, %v1696
    %v1769 = vmul.f32 %v1463, %v1700
    %v1770 = vmul.f32 %v1468, %v1700
    %v1771 = vmul.f32 %v1473, %v1704
    %v1772 = vmul.f32 %v1478, %v1704
    %v1773 = vmul.f32 %v1483, %v1708
    %v1774 = vmul.f32 %v1488, %v1708
    %v1775 = vmul.f32 %v1493, %v1712
    %v1776 = vmul.f32 %v1498, %v1712
    %v1777 = vmul.f32 %v1503, %v1716
    %v1778 = vmul.f32 %v1508, %v1716
    %v1779 = vmul.f32 %v1513, %v1720
    %v1780 = vmul.f32 %v1518, %v1720
    %v1781 = vmul.f32 %v1523, %v1724
    %v1782 = vmul.f32 %v1528, %v1724
    %v1783 = vmul.f32 %v1533, %v1728
    %v1784 = vmul.f32 %v1538, %v1728
    %v1785 = vmul.f32 %v1543, %v1732
    %v1786 = vmul.f32 %v1548, %v1732
    %v1787 = vmul.f32 %v1553, %v1736
    %v1788 = vmul.f32 %v1558, %v1736
    %v1789 = vmul.f32 %v1563, %v1740
    %v1790 = vmul.f32 %v1568, %v1740
    %v1791 = vmul.f32 %v1573, %v1744
    %v1792 = vmul.f32 %v1578, %v1744
    %v1793 = vsel %vm76, %v1761, 0.0
    %v1794 = vsel %vm76, %v1763, 0.0
    %v1795 = vadd.f32 %v1793, %v1794
    %v1796 = vsel %vm76, %v1765, 0.0
    %v1797 = vadd.f32 %v1795, %v1796
    %v1798 = vsel %vm76, %v1767, 0.0
    %v1799 = vadd.f32 %v1797, %v1798
    %v1800 = vsel %vm76, %v1769, 0.0
    %v1801 = vadd.f32 %v1799, %v1800
    %v1802 = vsel %vm76, %v1771, 0.0
    %v1803 = vadd.f32 %v1801, %v1802
    %v1804 = vsel %vm76, %v1773, 0.0
    %v1805 = vadd.f32 %v1803, %v1804
    %v1806 = vsel %vm76, %v1775, 0.0
    %v1807 = vadd.f32 %v1805, %v1806
    %v1808 = vsel %vm76, %v1777, 0.0
    %v1809 = vadd.f32 %v1807, %v1808
    %v1810 = vsel %vm76, %v1779, 0.0
    %v1811 = vadd.f32 %v1809, %v1810
    %v1812 = vsel %vm76, %v1781, 0.0
    %v1813 = vadd.f32 %v1811, %v1812
    %v1814 = vsel %vm76, %v1783, 0.0
    %v1815 = vadd.f32 %v1813, %v1814
    %v1816 = vsel %vm76, %v1785, 0.0
    %v1817 = vadd.f32 %v1815, %v1816
    %v1818 = vsel %vm76, %v1787, 0.0
    %v1819 = vadd.f32 %v1817, %v1818
    %v1820 = vsel %vm76, %v1789, 0.0
    %v1821 = vadd.f32 %v1819, %v1820
    %v1822 = vsel %vm76, %v1791, 0.0
    %v1823 = vadd.f32 %v1821, %v1822
    %v1824 = vsel %vm76, %v1762, 0.0
    %v1825 = vsel %vm76, %v1764, 0.0
    %v1826 = vadd.f32 %v1824, %v1825
    %v1827 = vsel %vm76, %v1766, 0.0
    %v1828 = vadd.f32 %v1826, %v1827
    %v1829 = vsel %vm76, %v1768, 0.0
    %v1830 = vadd.f32 %v1828, %v1829
    %v1831 = vsel %vm76, %v1770, 0.0
    %v1832 = vadd.f32 %v1830, %v1831
    %v1833 = vsel %vm76, %v1772, 0.0
    %v1834 = vadd.f32 %v1832, %v1833
    %v1835 = vsel %vm76, %v1774, 0.0
    %v1836 = vadd.f32 %v1834, %v1835
    %v1837 = vsel %vm76, %v1776, 0.0
    %v1838 = vadd.f32 %v1836, %v1837
    %v1839 = vsel %vm76, %v1778, 0.0
    %v1840 = vadd.f32 %v1838, %v1839
    %v1841 = vsel %vm76, %v1780, 0.0
    %v1842 = vadd.f32 %v1840, %v1841
    %v1843 = vsel %vm76, %v1782, 0.0
    %v1844 = vadd.f32 %v1842, %v1843
    %v1845 = vsel %vm76, %v1784, 0.0
    %v1846 = vadd.f32 %v1844, %v1845
    %v1847 = vsel %vm76, %v1786, 0.0
    %v1848 = vadd.f32 %v1846, %v1847
    %v1849 = vsel %vm76, %v1788, 0.0
    %v1850 = vadd.f32 %v1848, %v1849
    %v1851 = vsel %vm76, %v1790, 0.0
    %v1852 = vadd.f32 %v1850, %v1851
    %v1853 = vsel %vm76, %v1792, 0.0
    %v1854 = vadd.f32 %v1852, %v1853
    %v1855 = vld [vmem:[#allocation2 + $0x8] sm:$0xff]
    %v1856 = vld [vmem:[#allocation2 + $0x40] sm:$0xff]
    %v1857 = vld [vmem:[#allocation2 + $0x78] sm:$0xff]
    %v1858 = vld [vmem:[#allocation2 + $0xb0] sm:$0xff]
    %v1859 = vld [vmem:[#allocation2 + $0xe8] sm:$0xff]
    %v1860 = vld [vmem:[#allocation2 + $0x120] sm:$0xff]
    %v1861 = vld [vmem:[#allocation2 + $0x158] sm:$0xff]
    %v1862 = vld [vmem:[#allocation2 + $0x190] sm:$0xff]
    %v1863 = vld [vmem:[#allocation2 + $0x22] ss:$0 sm:$0xff]
    %v1864 = vld [vmem:[#allocation2 + $0x2a] ss:$0 sm:$0xff]
    %1873 = vrot.lane.b32.xlu0 %v1855, 64
    %v1874 = vpop.permute.xlu0 %1873
    %1875 = vrot.lane.b32.xlu0 %v1856, 64
    %v1876 = vpop.permute.xlu0 %1875
    %1877 = vrot.lane.b32.xlu0 %v1857, 64
    %v1878 = vpop.permute.xlu0 %1877
    %1879 = vrot.lane.b32.xlu0 %v1858, 64
    %v1880 = vpop.permute.xlu0 %1879
    %1881 = vrot.lane.b32.xlu0 %v1859, 64
    %v1882 = vpop.permute.xlu0 %1881
    %1883 = vrot.lane.b32.xlu0 %v1860, 64
    %v1884 = vpop.permute.xlu0 %1883
    %1885 = vrot.lane.b32.xlu0 %v1861, 64
    %v1886 = vpop.permute.xlu0 %1885
    %1887 = vrot.lane.b32.xlu0 %v1862, 64
    %v1888 = vpop.permute.xlu0 %1887
    %1899 = vrot.lane.b32.xlu0 %v1863, 48
    %v1900 = vpop.permute.xlu0 %1899
    %1901 = vrot.lane.b32.xlu0 %v1864, 48
    %v1902 = vpop.permute.xlu0 %1901
    %v1903 = vsel %vm71, %v1900, %v1902
    %v1906 = vsel %vm76, %v1823, 0
    %v1909 = vsel %vm76, %v1854, 0
    %1911 = vmatprep.subr.mxu0 0.0
    %1912 = vmatpush1.msra.mxu0 0.0
    %1913 = vmatprep.subr.mxu0 0.0
    %1914 = vmatpush1.msra.mxu0 0.0
    %1915 = vmatprep.subr.mxu0 0.0
    %1916 = vmatpush1.msra.mxu0 0.0
    %1917 = vmatprep.subr.mxu0 0.0
    %1918 = vmatpush1.msra.mxu0 0.0
    %1919 = vmatprep.subr.mxu0 0.0
    %1920 = vmatpush1.msra.mxu0 0.0
    %1921 = vmatprep.subr.mxu0 0.0
    %1922 = vmatpush1.msra.mxu0 0.0
    %1923 = vmatprep.subr.mxu0 0.0
    %1924 = vmatpush1.msra.mxu0 0.0
    %1925 = vmatprep.subr.mxu0 0.0
    %1926 = vmatpush1.msra.mxu0 0.0
    %1927 = vmatprep.subr.mxu0 0.0
    %1928 = vmatpush1.msra.mxu0 %v1888
    %1929 = vmatprep.subr.mxu0 0.0
    %1930 = vmatpush1.msra.mxu0 %v1886
    %1931 = vmatprep.subr.mxu0 0.0
    %1932 = vmatpush1.msra.mxu0 %v1884
    %1933 = vmatprep.subr.mxu0 0.0
    %1934 = vmatpush1.msra.mxu0 %v1882
    %1935 = vmatprep.subr.mxu0 0.0
    %1936 = vmatpush1.msra.mxu0 %v1880
    %1937 = vmatprep.subr.mxu0 0.0
    %1938 = vmatpush1.msra.mxu0 %v1878
    %1939 = vmatprep.subr.mxu0 0.0
    %1940 = vmatpush1.msra.mxu0 %v1876
    %1941 = vmatprep.subr.mxu0 0.0
    %1942 = vmatpush1.msra.mxu0 %v1874
    %1943 = vmatprep.subr.mxu0 0.0
    %1944 = vmatpush2.msra.mxu0 0.0
    %1945 = vmatprep.subr.mxu0 0.0
    %1946 = vmatpush2.msra.mxu0 0.0
    %1947 = vmatprep.subr.mxu0 0.0
    %1948 = vmatpush2.msra.mxu0 0.0
    %1949 = vmatprep.subr.mxu0 0.0
    %1950 = vmatpush2.msra.mxu0 0.0
    %1951 = vmatprep.subr.mxu0 0.0
    %1952 = vmatpush2.msra.mxu0 0.0
    %1953 = vmatprep.subr.mxu0 0.0
    %1954 = vmatpush2.msra.mxu0 0.0
    %1955 = vmatprep.subr.mxu0 0.0
    %1956 = vmatpush2.msra.mxu0 0.0
    %1957 = vmatprep.subr.mxu0 0.0
    %1958 = vmatpush2.msra.mxu0 0.0
    %1959 = vmatprep.subr.mxu0 0.0
    %1960 = vmatpush2.msra.mxu0 0.0
    %1961 = vmatprep.subr.mxu0 0.0
    %1962 = vmatpush2.msra.mxu0 0.0
    %1963 = vmatprep.subr.mxu0 0.0
    %1964 = vmatpush2.msra.mxu0 0.0
    %1965 = vmatprep.subr.mxu0 0.0
    %1966 = vmatpush2.msra.mxu0 0.0
    %1967 = vmatprep.subr.mxu0 0.0
    %1968 = vmatpush2.msra.mxu0 0.0
    %1969 = vmatprep.subr.mxu0 0.0
    %1970 = vmatpush2.msra.mxu0 0.0
    %1971 = vmatprep.subr.mxu0 0.0
    %1972 = vmatpush2.msra.mxu0 0.0
    %1973 = vmatprep.subr.mxu0 0.0
    %1974 = vmatpush2.msra.mxu0 0.0
    %1975 = vmatprep.mubr.f32.mxu0 0.0
    %1976 = vmatmul.mubr.f32.gmra.mxu0 %v1906
    %v1977 = vpop.f32.mrf.mxu0
    %v1978 = vadd.f32 %v1903, %v1977
    %v1979 = vpop.f32.mrf.mxu0
    %1980 = vmatprep.mubr.f32.mxu0 0.0
    %1981 = vmatmul.mubr.f32.gmra.mxu0 %v1909
    %v1982 = vpop.f32.mrf.mxu0
    %v1983 = vadd.f32 %v1903, %v1982
    %v1984 = vpop.f32.mrf.mxu0
    %1985 = vdwg.mxu0
    %v1986 = vadd.f32 %v32, %v1978
    %v1987 = vadd.f32 %v33, %v1983
    %v1988 = vld [vmem:[#allocation2 + $0x18] sm:$0xff]
    %v1989 = vld [vmem:[#allocation2 + $0x50] sm:$0xff]
    %v1990 = vld [vmem:[#allocation2 + $0x88] sm:$0xff]
    %v1991 = vld [vmem:[#allocation2 + $0xc0] sm:$0xff]
    %v1992 = vld [vmem:[#allocation2 + $0xf8] sm:$0xff]
    %v1993 = vld [vmem:[#allocation2 + $0x130] sm:$0xff]
    %v1994 = vld [vmem:[#allocation2 + $0x168] sm:$0xff]
    %v1995 = vld [vmem:[#allocation2 + $0x1a0] sm:$0xff]
    %2004 = vrot.lane.b32.xlu0 %v1988, 64
    %v2005 = vpop.permute.xlu0 %2004
    %2006 = vrot.lane.b32.xlu0 %v1989, 64
    %v2007 = vpop.permute.xlu0 %2006
    %2008 = vrot.lane.b32.xlu0 %v1990, 64
    %v2009 = vpop.permute.xlu0 %2008
    %2010 = vrot.lane.b32.xlu0 %v1991, 64
    %v2011 = vpop.permute.xlu0 %2010
    %2012 = vrot.lane.b32.xlu0 %v1992, 64
    %v2013 = vpop.permute.xlu0 %2012
    %2014 = vrot.lane.b32.xlu0 %v1993, 64
    %v2015 = vpop.permute.xlu0 %2014
    %2016 = vrot.lane.b32.xlu0 %v1994, 64
    %v2017 = vpop.permute.xlu0 %2016
    %2018 = vrot.lane.b32.xlu0 %v1995, 64
    %v2019 = vpop.permute.xlu0 %2018
    %v2029 = vsel %vm76, %v1986, 0
    %v2032 = vsel %vm76, %v1987, 0
    %2034 = vmatprep.subr.mxu0 0.0
    %2035 = vmatpush1.msra.mxu0 0.0
    %2036 = vmatprep.subr.mxu0 0.0
    %2037 = vmatpush1.msra.mxu0 0.0
    %2038 = vmatprep.subr.mxu0 0.0
    %2039 = vmatpush1.msra.mxu0 0.0
    %2040 = vmatprep.subr.mxu0 0.0
    %2041 = vmatpush1.msra.mxu0 0.0
    %2042 = vmatprep.subr.mxu0 0.0
    %2043 = vmatpush1.msra.mxu0 0.0
    %2044 = vmatprep.subr.mxu0 0.0
    %2045 = vmatpush1.msra.mxu0 0.0
    %2046 = vmatprep.subr.mxu0 0.0
    %2047 = vmatpush1.msra.mxu0 0.0
    %2048 = vmatprep.subr.mxu0 0.0
    %2049 = vmatpush1.msra.mxu0 0.0
    %2050 = vmatprep.subr.mxu0 0.0
    %2051 = vmatpush1.msra.mxu0 %v2019
    %2052 = vmatprep.subr.mxu0 0.0
    %2053 = vmatpush1.msra.mxu0 %v2017
    %2054 = vmatprep.subr.mxu0 0.0
    %2055 = vmatpush1.msra.mxu0 %v2015
    %2056 = vmatprep.subr.mxu0 0.0
    %2057 = vmatpush1.msra.mxu0 %v2013
    %2058 = vmatprep.subr.mxu0 0.0
    %2059 = vmatpush1.msra.mxu0 %v2011
    %2060 = vmatprep.subr.mxu0 0.0
    %2061 = vmatpush1.msra.mxu0 %v2009
    %2062 = vmatprep.subr.mxu0 0.0
    %2063 = vmatpush1.msra.mxu0 %v2007
    %2064 = vmatprep.subr.mxu0 0.0
    %2065 = vmatpush1.msra.mxu0 %v2005
    %2066 = vmatprep.subr.mxu0 0.0
    %2067 = vmatpush2.msra.mxu0 0.0
    %2068 = vmatprep.subr.mxu0 0.0
    %2069 = vmatpush2.msra.mxu0 0.0
    %2070 = vmatprep.subr.mxu0 0.0
    %2071 = vmatpush2.msra.mxu0 0.0
    %2072 = vmatprep.subr.mxu0 0.0
    %2073 = vmatpush2.msra.mxu0 0.0
    %2074 = vmatprep.subr.mxu0 0.0
    %2075 = vmatpush2.msra.mxu0 0.0
    %2076 = vmatprep.subr.mxu0 0.0
    %2077 = vmatpush2.msra.mxu0 0.0
    %2078 = vmatprep.subr.mxu0 0.0
    %2079 = vmatpush2.msra.mxu0 0.0
    %2080 = vmatprep.subr.mxu0 0.0
    %2081 = vmatpush2.msra.mxu0 0.0
    %2082 = vmatprep.subr.mxu0 0.0
    %2083 = vmatpush2.msra.mxu0 0.0
    %2084 = vmatprep.subr.mxu0 0.0
    %2085 = vmatpush2.msra.mxu0 0.0
    %2086 = vmatprep.subr.mxu0 0.0
    %2087 = vmatpush2.msra.mxu0 0.0
    %2088 = vmatprep.subr.mxu0 0.0
    %2089 = vmatpush2.msra.mxu0 0.0
    %2090 = vmatprep.subr.mxu0 0.0
    %2091 = vmatpush2.msra.mxu0 0.0
    %2092 = vmatprep.subr.mxu0 0.0
    %2093 = vmatpush2.msra.mxu0 0.0
    %2094 = vmatprep.subr.mxu0 0.0
    %2095 = vmatpush2.msra.mxu0 0.0
    %2096 = vmatprep.subr.mxu0 0.0
    %2097 = vmatpush2.msra.mxu0 0.0
    %2098 = vmatprep.mubr.f32.mxu0 0.0
    %2099 = vmatmul.mubr.f32.gmra.mxu0 %v2029
    %v2100 = vpop.f32.mrf.mxu0
    %v2101 = vadd.f32 0.0, %v2100
    %v2102 = vpop.f32.mrf.mxu0
    %2103 = vmatprep.mubr.f32.mxu0 0.0
    %2104 = vmatmul.mubr.f32.gmra.mxu0 %v2032
    %v2105 = vpop.f32.mrf.mxu0
    %v2106 = vadd.f32 0.0, %v2105
    %v2107 = vpop.f32.mrf.mxu0
    %2108 = vdwg.mxu0
    %v2109 = vmul.f32 %v1986, %v1986
    %v2110 = vmul.f32 %v1987, %v1987
    %v2112 = vsel %vm76, %v2109, 0
    %v2115 = vsel %vm76, %v2110, 0
    %2117 = vmatprep.subr.mxu0 0.0
    %2118 = vmatpush1.msra.mxu0 0.0
    %2119 = vmatprep.subr.mxu0 0.0
    %2120 = vmatpush1.msra.mxu0 0.0
    %2121 = vmatprep.subr.mxu0 0.0
    %2122 = vmatpush1.msra.mxu0 0.0
    %2123 = vmatprep.subr.mxu0 0.0
    %2124 = vmatpush1.msra.mxu0 0.0
    %2125 = vmatprep.subr.mxu0 0.0
    %2126 = vmatpush1.msra.mxu0 0.0
    %2127 = vmatprep.subr.mxu0 0.0
    %2128 = vmatpush1.msra.mxu0 0.0
    %2129 = vmatprep.subr.mxu0 0.0
    %2130 = vmatpush1.msra.mxu0 0.0
    %2131 = vmatprep.subr.mxu0 0.0
    %2132 = vmatpush1.msra.mxu0 0.0
    %2133 = vmatprep.subr.mxu0 0.0
    %2134 = vmatpush1.msra.mxu0 %v2019
    %2135 = vmatprep.subr.mxu0 0.0
    %2136 = vmatpush1.msra.mxu0 %v2017
    %2137 = vmatprep.subr.mxu0 0.0
    %2138 = vmatpush1.msra.mxu0 %v2015
    %2139 = vmatprep.subr.mxu0 0.0
    %2140 = vmatpush1.msra.mxu0 %v2013
    %2141 = vmatprep.subr.mxu0 0.0
    %2142 = vmatpush1.msra.mxu0 %v2011
    %2143 = vmatprep.subr.mxu0 0.0
    %2144 = vmatpush1.msra.mxu0 %v2009
    %2145 = vmatprep.subr.mxu0 0.0
    %2146 = vmatpush1.msra.mxu0 %v2007
    %2147 = vmatprep.subr.mxu0 0.0
    %2148 = vmatpush1.msra.mxu0 %v2005
    %2149 = vmatprep.subr.mxu0 0.0
    %2150 = vmatpush2.msra.mxu0 0.0
    %2151 = vmatprep.subr.mxu0 0.0
    %2152 = vmatpush2.msra.mxu0 0.0
    %2153 = vmatprep.subr.mxu0 0.0
    %2154 = vmatpush2.msra.mxu0 0.0
    %2155 = vmatprep.subr.mxu0 0.0
    %2156 = vmatpush2.msra.mxu0 0.0
    %2157 = vmatprep.subr.mxu0 0.0
    %2158 = vmatpush2.msra.mxu0 0.0
    %2159 = vmatprep.subr.mxu0 0.0
    %2160 = vmatpush2.msra.mxu0 0.0
    %2161 = vmatprep.subr.mxu0 0.0
    %2162 = vmatpush2.msra.mxu0 0.0
    %2163 = vmatprep.subr.mxu0 0.0
    %2164 = vmatpush2.msra.mxu0 0.0
    %2165 = vmatprep.subr.mxu0 0.0
    %2166 = vmatpush2.msra.mxu0 0.0
    %2167 = vmatprep.subr.mxu0 0.0
    %2168 = vmatpush2.msra.mxu0 0.0
    %2169 = vmatprep.subr.mxu0 0.0
    %2170 = vmatpush2.msra.mxu0 0.0
    %2171 = vmatprep.subr.mxu0 0.0
    %2172 = vmatpush2.msra.mxu0 0.0
    %2173 = vmatprep.subr.mxu0 0.0
    %2174 = vmatpush2.msra.mxu0 0.0
    %2175 = vmatprep.subr.mxu0 0.0
    %2176 = vmatpush2.msra.mxu0 0.0
    %2177 = vmatprep.subr.mxu0 0.0
    %2178 = vmatpush2.msra.mxu0 0.0
    %2179 = vmatprep.subr.mxu0 0.0
    %2180 = vmatpush2.msra.mxu0 0.0
    %2181 = vmatprep.mubr.f32.mxu0 0.0
    %2182 = vmatmul.mubr.f32.gmra.mxu0 %v2112
    %v2183 = vpop.f32.mrf.mxu0
    %v2184 = vadd.f32 0.0, %v2183
    %v2185 = vpop.f32.mrf.mxu0
    %2186 = vmatprep.mubr.f32.mxu0 0.0
    %2187 = vmatmul.mubr.f32.gmra.mxu0 %v2115
    %v2188 = vpop.f32.mrf.mxu0
    %v2189 = vadd.f32 0.0, %v2188
    %v2190 = vpop.f32.mrf.mxu0
    %2191 = vdwg.mxu0
    %v2192 = vsub.f32 %v1986, %v2101
    %v2193 = vsub.f32 %v1987, %v2106
    %v2194 = vmul.f32 %v2101, %v2101
    %v2195 = vmul.f32 %v2106, %v2106
    %v2196 = vsub.f32 %v2184, %v2194
    %v2197 = vsub.f32 %v2189, %v2195
    %v2198 = vadd.f32 %v2196, 1e-05
    %v2199 = vadd.f32 %v2197, 1e-05
    %v2200 = vrsqrt.pop %v2198
    %v2201 = vrsqrt.pop %v2199
    %v2202 = vmul.f32 %v2192, %v2200
    %v2203 = vmul.f32 %v2193, %v2201
    %v2204 = vld [vmem:[#allocation2 + $0x23] ss:$0 sm:$0xff]
    %v2205 = vld [vmem:[#allocation2 + $0x2b] ss:$0 sm:$0xff]
    %2208 = vrot.lane.b32.xlu0 %v2204, 48
    %v2209 = vpop.permute.xlu0 %2208
    %2210 = vrot.lane.b32.xlu0 %v2205, 48
    %v2211 = vpop.permute.xlu0 %2210
    %v2212 = vsel %vm71, %v2209, %v2211
    %v2214 = vmul.f32 %v2202, %v2212
    %v2215 = vmul.f32 %v2203, %v2212
    %v2216 = vld [vmem:[#allocation2 + $0x24] ss:$0 sm:$0xff]
    %v2217 = vld [vmem:[#allocation2 + $0x2c] ss:$0 sm:$0xff]
    %2220 = vrot.lane.b32.xlu0 %v2216, 48
    %v2221 = vpop.permute.xlu0 %2220
    %2222 = vrot.lane.b32.xlu0 %v2217, 48
    %v2223 = vpop.permute.xlu0 %2222
    %v2224 = vsel %vm71, %v2221, %v2223
    %v2226 = vadd.f32 %v2214, %v2224
    %v2227 = vadd.f32 %v2215, %v2224
    %v2228 = vld [vmem:[#allocation2 + $0x10] sm:$0xff]
    %v2229 = vld [vmem:[#allocation2 + $0x48] sm:$0xff]
    %v2230 = vld [vmem:[#allocation2 + $0x80] sm:$0xff]
    %v2231 = vld [vmem:[#allocation2 + $0xb8] sm:$0xff]
    %v2232 = vld [vmem:[#allocation2 + $0xf0] sm:$0xff]
    %v2233 = vld [vmem:[#allocation2 + $0x128] sm:$0xff]
    %v2234 = vld [vmem:[#allocation2 + $0x160] sm:$0xff]
    %v2235 = vld [vmem:[#allocation2 + $0x198] sm:$0xff]
    %s2236 = scalar_lea.vmem [#allocation2], 33
    %v2237 = vld [vmem:[%s2236] ss:$8 sm:$0x7]
    %v2239 = vlaneseq
    %v2240 = vshrl.u32 %v2239, 7
    %v2241 = vsub.s32 0, %v2240
    %v2242 = vrot.slane %v2237, %v2241
    %v2243 = vlaneseq
    %v2244 = vshrl.u32 %v2243, 7
    %v2245 = vsub.s32 1, %v2244
    %v2246 = vrot.slane %v2237, %v2245
    %v2247 = vlaneseq
    %v2248 = vshrl.u32 %v2247, 7
    %v2249 = vsub.s32 2, %v2248
    %v2250 = vrot.slane %v2237, %v2249
    %2251 = vrot.lane.b32.xlu0 %v2242, 48
    %v2252 = vpop.permute.xlu0 %2251
    %2253 = vrot.lane.b32.xlu0 %v2246, 48
    %v2254 = vpop.permute.xlu0 %2253
    %2255 = vrot.lane.b32.xlu0 %v2250, 48
    %v2256 = vpop.permute.xlu0 %2255
    %v2257 = vsel %vm71, %v2252, %v2254
    %v2258 = vsel %vm71, %v2254, %v2256
    %v2262 = vsel %vm76, %v2226, 0
    %v2265 = vsel %vm76, %v2227, 0
    %2267 = vmatprep.subr.mxu0 0.0
    %2268 = vmatpush1.msra.mxu0 0.0
    %2269 = vmatprep.subr.mxu0 0.0
    %2270 = vmatpush1.msra.mxu0 0.0
    %2271 = vmatprep.subr.mxu0 0.0
    %2272 = vmatpush1.msra.mxu0 0.0
    %2273 = vmatprep.subr.mxu0 0.0
    %2274 = vmatpush1.msra.mxu0 0.0
    %2275 = vmatprep.subr.mxu0 0.0
    %2276 = vmatpush1.msra.mxu0 0.0
    %2277 = vmatprep.subr.mxu0 0.0
    %2278 = vmatpush1.msra.mxu0 0.0
    %2279 = vmatprep.subr.mxu0 0.0
    %2280 = vmatpush1.msra.mxu0 0.0
    %2281 = vmatprep.subr.mxu0 0.0
    %2282 = vmatpush1.msra.mxu0 0.0
    %2283 = vmatprep.subr.mxu0 %v1995
    %2284 = vmatpush1.msra.mxu0 %v2235
    %2285 = vmatprep.subr.mxu0 %v1994
    %2286 = vmatpush1.msra.mxu0 %v2234
    %2287 = vmatprep.subr.mxu0 %v1993
    %2288 = vmatpush1.msra.mxu0 %v2233
    %2289 = vmatprep.subr.mxu0 %v1992
    %2290 = vmatpush1.msra.mxu0 %v2232
    %2291 = vmatprep.subr.mxu0 %v1991
    %2292 = vmatpush1.msra.mxu0 %v2231
    %2293 = vmatprep.subr.mxu0 %v1990
    %2294 = vmatpush1.msra.mxu0 %v2230
    %2295 = vmatprep.subr.mxu0 %v1989
    %2296 = vmatpush1.msra.mxu0 %v2229
    %2297 = vmatprep.subr.mxu0 %v1988
    %2298 = vmatpush1.msra.mxu0 %v2228
    %2299 = vmatprep.subr.mxu0 0.0
    %2300 = vmatpush2.msra.mxu0 0.0
    %2301 = vmatprep.subr.mxu0 0.0
    %2302 = vmatpush2.msra.mxu0 0.0
    %2303 = vmatprep.subr.mxu0 0.0
    %2304 = vmatpush2.msra.mxu0 0.0
    %2305 = vmatprep.subr.mxu0 0.0
    %2306 = vmatpush2.msra.mxu0 0.0
    %2307 = vmatprep.subr.mxu0 0.0
    %2308 = vmatpush2.msra.mxu0 0.0
    %2309 = vmatprep.subr.mxu0 0.0
    %2310 = vmatpush2.msra.mxu0 0.0
    %2311 = vmatprep.subr.mxu0 0.0
    %2312 = vmatpush2.msra.mxu0 0.0
    %2313 = vmatprep.subr.mxu0 0.0
    %2314 = vmatpush2.msra.mxu0 0.0
    %2315 = vmatprep.subr.mxu0 0.0
    %2316 = vmatpush2.msra.mxu0 0.0
    %2317 = vmatprep.subr.mxu0 0.0
    %2318 = vmatpush2.msra.mxu0 0.0
    %2319 = vmatprep.subr.mxu0 0.0
    %2320 = vmatpush2.msra.mxu0 0.0
    %2321 = vmatprep.subr.mxu0 0.0
    %2322 = vmatpush2.msra.mxu0 0.0
    %2323 = vmatprep.subr.mxu0 0.0
    %2324 = vmatpush2.msra.mxu0 0.0
    %2325 = vmatprep.subr.mxu0 0.0
    %2326 = vmatpush2.msra.mxu0 0.0
    %2327 = vmatprep.subr.mxu0 0.0
    %2328 = vmatpush2.msra.mxu0 0.0
    %2329 = vmatprep.subr.mxu0 0.0
    %2330 = vmatpush2.msra.mxu0 0.0
    %2331 = vmatprep.mubr.f32.mxu0 0.0
    %2332 = vmatmul.mubr.f32.gmra.mxu0 %v2262
    %v2333 = vpop.f32.mrf.mxu0
    %v2334 = vadd.f32 %v2257, %v2333
    %v2335 = vpop.f32.mrf.mxu0
    %v2336 = vadd.f32 %v2258, %v2335
    %2337 = vmatprep.mubr.f32.mxu0 0.0
    %2338 = vmatmul.mubr.f32.gmra.mxu0 %v2265
    %v2339 = vpop.f32.mrf.mxu0
    %v2340 = vadd.f32 %v2257, %v2339
    %v2341 = vpop.f32.mrf.mxu0
    %v2342 = vadd.f32 %v2258, %v2341
    %2343 = vdwg.mxu0
    %v2344 = vmul.f32 %v2334, 0.5
    %v2345 = vmul.f32 %v2340, 0.5
    %v2346 = vmul.f32 %v2334, 0.70710677
    %v2347 = vmul.f32 %v2340, 0.70710677
    %v2348 = verf.f32.pop %v2346
    %v2349 = verf.f32.pop %v2347
    %v2350 = vadd.f32 %v2348, 1.0
    %v2351 = vadd.f32 %v2349, 1.0
    %v2352 = vmul.f32 %v2344, %v2350
    %v2353 = vmul.f32 %v2345, %v2351
    %v2354 = vxor.u32 %v2336, 2147483648
    %v2355 = vxor.u32 %v2342, 2147483648
    %v2356 = vmul.f32 %v2354, 1.442695
    %v2357 = vpow.pop %v2356
    %v2358 = vmul.f32 %v2355, 1.442695
    %v2359 = vpow.pop %v2358
    %v2360 = vadd.f32 %v2357, 1.0
    %v2361 = vadd.f32 %v2359, 1.0
    %v2362 = vrcp.pop %v2360
    %v2363 = vmul.f32 1.0, %v2362
    %v2364 = vrcp.pop %v2361
    %v2365 = vmul.f32 1.0, %v2364
    %v2366 = vld [vmem:[%s2] sm:$0xff]
    %v2367 = vld [vmem:[%s2 + $0x8] sm:$0xff]
    %v2368 = vld [vmem:[%s2 + $0x10] sm:$0xff]
    %v2369 = vld [vmem:[%s2 + $0x18] sm:$0xff]
    %v2370 = vld [vmem:[%s2 + $0x20] sm:$0xff]
    %v2371 = vld [vmem:[%s2 + $0x28] sm:$0xff]
    %v2372 = vld [vmem:[%s2 + $0x30] sm:$0xff]
    %v2373 = vld [vmem:[%s2 + $0x38] sm:$0xff]
    %v2374 = vld [vmem:[%s2 + $0x40] sm:$0xff]
    %v2375 = vld [vmem:[%s2 + $0x48] sm:$0xff]
    %v2376 = vld [vmem:[%s2 + $0x50] sm:$0xff]
    %v2377 = vld [vmem:[%s2 + $0x58] sm:$0xff]
    %v2378 = vld [vmem:[%s2 + $0x60] sm:$0xff]
    %v2379 = vld [vmem:[%s2 + $0x68] sm:$0xff]
    %v2380 = vld [vmem:[%s2 + $0x70] sm:$0xff]
    %v2381 = vld [vmem:[%s2 + $0x78] sm:$0xff]
    %v2382 = vld [vmem:[#allocation2 + $0x27] ss:$0 sm:$0xff]
    %2384 = vrot.lane.b32.xlu0 %v2382, 48
    %v2385 = vpop.permute.xlu0 %2384
    %2387 = vmatprep.subr.mxu0 0.0
    %2388 = vmatpush1.msra.mxu0 %v2381
    %2389 = vmatprep.subr.mxu0 0.0
    %2390 = vmatpush1.msra.mxu0 %v2380
    %2391 = vmatprep.subr.mxu0 0.0
    %2392 = vmatpush1.msra.mxu0 %v2379
    %2393 = vmatprep.subr.mxu0 0.0
    %2394 = vmatpush1.msra.mxu0 %v2378
    %2395 = vmatprep.subr.mxu0 0.0
    %2396 = vmatpush1.msra.mxu0 %v2377
    %2397 = vmatprep.subr.mxu0 0.0
    %2398 = vmatpush1.msra.mxu0 %v2376
    %2399 = vmatprep.subr.mxu0 0.0
    %2400 = vmatpush1.msra.mxu0 %v2375
    %2401 = vmatprep.subr.mxu0 0.0
    %2402 = vmatpush1.msra.mxu0 %v2374
    %2403 = vmatprep.subr.mxu0 0.0
    %2404 = vmatpush1.msra.mxu0 %v2373
    %2405 = vmatprep.subr.mxu0 0.0
    %2406 = vmatpush1.msra.mxu0 %v2372
    %2407 = vmatprep.subr.mxu0 0.0
    %2408 = vmatpush1.msra.mxu0 %v2371
    %2409 = vmatprep.subr.mxu0 0.0
    %2410 = vmatpush1.msra.mxu0 %v2370
    %2411 = vmatprep.subr.mxu0 0.0
    %2412 = vmatpush1.msra.mxu0 %v2369
    %2413 = vmatprep.subr.mxu0 0.0
    %2414 = vmatpush1.msra.mxu0 %v2368
    %2415 = vmatprep.subr.mxu0 0.0
    %2416 = vmatpush1.msra.mxu0 %v2367
    %2417 = vmatprep.subr.mxu0 0.0
    %2418 = vmatpush1.msra.mxu0 %v2366
    %2419 = vmatprep.subr.mxu0 0.0
    %2420 = vmatpush2.msra.mxu0 0.0
    %2421 = vmatprep.subr.mxu0 0.0
    %2422 = vmatpush2.msra.mxu0 0.0
    %2423 = vmatprep.subr.mxu0 0.0
    %2424 = vmatpush2.msra.mxu0 0.0
    %2425 = vmatprep.subr.mxu0 0.0
    %2426 = vmatpush2.msra.mxu0 0.0
    %2427 = vmatprep.subr.mxu0 0.0
    %2428 = vmatpush2.msra.mxu0 0.0
    %2429 = vmatprep.subr.mxu0 0.0
    %2430 = vmatpush2.msra.mxu0 0.0
    %2431 = vmatprep.subr.mxu0 0.0
    %2432 = vmatpush2.msra.mxu0 0.0
    %2433 = vmatprep.subr.mxu0 0.0
    %2434 = vmatpush2.msra.mxu0 0.0
    %2435 = vmatprep.subr.mxu0 0.0
    %2436 = vmatpush2.msra.mxu0 0.0
    %2437 = vmatprep.subr.mxu0 0.0
    %2438 = vmatpush2.msra.mxu0 0.0
    %2439 = vmatprep.subr.mxu0 0.0
    %2440 = vmatpush2.msra.mxu0 0.0
    %2441 = vmatprep.subr.mxu0 0.0
    %2442 = vmatpush2.msra.mxu0 0.0
    %2443 = vmatprep.subr.mxu0 0.0
    %2444 = vmatpush2.msra.mxu0 0.0
    %2445 = vmatprep.subr.mxu0 0.0
    %2446 = vmatpush2.msra.mxu0 0.0
    %2447 = vmatprep.subr.mxu0 0.0
    %2448 = vmatpush2.msra.mxu0 0.0
    %2449 = vmatprep.subr.mxu0 0.0
    %2450 = vmatpush2.msra.mxu0 0.0
    %2451 = vmatprep.mubr.f32.mxu0 0.0
    %2452 = vmatmul.mubr.f32.gmra.mxu0 %v2352
    %v2453 = vpop.f32.mrf.mxu0
    %v2454 = vadd.f32 %v2385, %v2453
    %v2455 = vpop.f32.mrf.mxu0
    %2456 = vmatprep.mubr.f32.mxu0 0.0
    %2457 = vmatmul.mubr.f32.gmra.mxu0 %v2353
    %v2458 = vpop.f32.mrf.mxu0
    %v2459 = vadd.f32 %v2385, %v2458
    %v2460 = vpop.f32.mrf.mxu0
    %2461 = vdwg.mxu0
    %v2462 = vmul.f32 %v2363, %v2454
    %v2463 = vmul.f32 %v2365, %v2459
    %v2464 = vsub.f32 1.0, %v2363
    %v2465 = vsub.f32 1.0, %v2365
    %2468 = vrot.lane.b32.xlu0 %v2336, 96
    %v2469 = vpop.permute.xlu0 %2468
    %2470 = vrot.lane.b32.xlu0 %v2342, 96
    %v2471 = vpop.permute.xlu0 %2470
    %v2474 = vmul.f32 %v2464, %v2469
    %v2475 = vmul.f32 %v2465, %v2471
    %v2476 = vadd.f32 %v2462, %v2474
    %v2477 = vadd.f32 %v2463, %v2475
    %vm2478 = vcmask 261120
    %v2479 = vsel %vm2478, %v2476, 0.0
    %2480 = vadd.xlane.f32.xlu0 %v2479
    %v2481 = vpop.xlane.xlu0 %2480
    %v2482 = vsel %vm2478, %v2477, 0.0
    %2483 = vadd.xlane.f32.xlu0 %v2482
    %v2484 = vpop.xlane.xlu0 %2483
    %v2485 = vrcp.pop 32.0
    %v2486 = vmul.f32 %v2481, %v2485
    %v2487 = vmul.f32 %v2484, %v2485
    %v2488 = vsub.f32 %v2476, %v2486
    %v2489 = vsub.f32 %v2477, %v2487
    %v2490 = vmul.f32 %v2488, %v2488
    %v2491 = vmul.f32 %v2489, %v2489
    %v2492 = vsel %vm2478, %v2490, 0.0
    %2493 = vadd.xlane.f32.xlu0 %v2492
    %v2494 = vpop.xlane.xlu0 %2493
    %v2495 = vsel %vm2478, %v2491, 0.0
    %2496 = vadd.xlane.f32.xlu0 %v2495
    %v2497 = vpop.xlane.xlu0 %2496
    %v2498 = vmul.f32 %v2494, %v2485
    %v2499 = vmul.f32 %v2497, %v2485
    %v2500 = vadd.f32 %v2498, 1e-05
    %v2501 = vadd.f32 %v2499, 1e-05
    %v2502 = vrsqrt.pop %v2500
    %v2503 = vrsqrt.pop %v2501
    %v2504 = vmul.f32 %v2488, %v2502
    %v2505 = vmul.f32 %v2489, %v2503
    %v2506 = vld [vmem:[#allocation2 + $0x25] ss:$0 sm:$0xff]
    %2508 = vrot.lane.b32.xlu0 %v2506, 48
    %v2509 = vpop.permute.xlu0 %2508
    %v2511 = vmul.f32 %v2504, %v2509
    %v2512 = vmul.f32 %v2505, %v2509
    %v2513 = vld [vmem:[#allocation2 + $0x26] ss:$0 sm:$0xff]
    %2515 = vrot.lane.b32.xlu0 %v2513, 48
    %v2516 = vpop.permute.xlu0 %2515
    %v2518 = vadd.f32 %v2511, %v2516
    %v2519 = vadd.f32 %v2512, %v2516
    %2520 = vst.msk [vmem:[#allocation5] sm:$0xff] %vm2478, %v2518
    %2521 = vst.msk [vmem:[#allocation5 + $0x8] sm:$0xff] %vm2478, %v2519
    // Predicated region
    $region22: #{tpu_custom_call.1} parent=1 // pred_check
      _
    $region23: #{tpu_custom_call.1} parent=1 // pred_check_branch
      %2523 = sbr.rel (0) target = $region25
    $region24: #{tpu_custom_call.1} parent=1 // pred_region
      %s2525 = ssub.s32 256, 256
      %2526 = vsyncadd [#allocation4], %s2525
      %s2527 = sshll.u32 [#allocation5], 4
      %s2528 = int_to_ptr.vmem [resolvable:$true] %s2527
      %2533 = dma.vmem_to_hbm [thread:$0]  %s2528, 256, %s4, [#allocation4], 128, 128, 8
    $region25: #{tpu_custom_call.1} parent=1 // pred_fallthru
      _
    // Predicated region
    $region26: #{tpu_custom_call.1} parent=1 // pred_check
      _
    $region27: #{tpu_custom_call.1} parent=1 // pred_check_branch
      %2535 = sbr.rel (0) target = $region29
    $region28: #{tpu_custom_call.1} parent=1 // pred_region
      %2536 = dma.done [#allocation4], 256
    $region29: #{tpu_custom_call.1} parent=1 // pred_fallthru
      _
    %2537 = vsyncpa [#allocation3], 1
    %2538 = vsyncpa [#allocation4], 1

</llo_original>
